<compile_context>
chip_gen: v7x
topology: tpu7x:2x2x1
jax: 0.10.0
libtpu: 0.0.40
codegen_flags: <defaults>
</compile_context>

<pallas_src>
import functools
import numpy as np
import jax
import jax.numpy as jnp
from jax import lax
from jax.experimental import pallas as pl
from jax.experimental.pallas import tpu as pltpu

EPS = 1e-5                       # nn.LayerNorm default eps


def _vmem_limit_bytes():
    # Re-derive the scoped-VMEM budget per chip generation (v7x has only 64 MiB).
    try:
        cap = int(pltpu.get_tpu_info().vmem_capacity_bytes)
        return max(32 * 1024 * 1024, (cap * 3) // 4)
    except Exception:
        return 48 * 1024 * 1024


VMEM_LIMIT = _vmem_limit_bytes()


def _pick_tq(L):
    # Bigger tiles on v5e (128 MiB VMEM / slow HBM); 256 elsewhere (v7x = 64 MiB).
    target = 256
    try:
        kind = jax.devices()[0].device_kind.lower()
        if "v5 lite" in kind or "v5e" in kind or "v5lite" in kind:
            target = 512
    except Exception:
        pass
    tq = min(L, target)
    while tq > 1 and L % tq:
        tq //= 2
    return tq


def _const_spec(shape, index_map, single_buffer):
    # Constant-index operands (weights/biases) never get re-DMA'd; single-buffer
    # them so only one copy sits in VMEM.
    if single_buffer:
        return pl.BlockSpec(shape, index_map, pipeline_mode=pl.Buffered(1))
    return pl.BlockSpec(shape, index_map)


def _layernorm(x, w, b):
    mu = jnp.mean(x, axis=-1, keepdims=True)
    var = jnp.mean((x - mu) ** 2, axis=-1, keepdims=True)
    return (x - mu) * lax.rsqrt(var + EPS) * w + b


# ------------------- kernel A: LN1 + fused qkv/gate projection ---------------

def qkv_proj_kernel(x_ref, ln1_w_ref, ln1_b_ref, proj_w_ref, proj_b_ref,
                    q_ref, k_ref, v_ref, xo_ref, *, d_model):
    x = x_ref[0]                                                   # (tq, D) f32
    ln_x = _layernorm(x, ln1_w_ref[...], ln1_b_ref[...])
    p = jnp.dot(ln_x.astype(jnp.bfloat16), proj_w_ref[...],
                preferred_element_type=jnp.float32) + proj_b_ref[...]   # (tq, 4D)
    # lane-dense (tq, D) slabs; head split happens in the retention kernel
    q_ref[0] = p[:, 0 * d_model:1 * d_model].astype(jnp.bfloat16)
    k_ref[0] = p[:, 1 * d_model:2 * d_model].astype(jnp.bfloat16)
    v_ref[0] = p[:, 2 * d_model:3 * d_model].astype(jnp.bfloat16)
    xo_ref[0] = p[:, 3 * d_model:4 * d_model]                      # gate input, f32


# -------- kernel B: triangular-grid retention with decay folded into q/k -----

def retention_kernel(qs_ref, ks_ref,                 # scalar prefetch (SMEM, int32)
                     q_ref, k_ref, v_ref,            # (1, tq/tk, D) bf16
                     o_ref,                          # (1, tq, D) f32
                     acc_ref,                        # (tq, D) f32 scratch
                     *, num_heads, head_dim, tq, tk, log_gammas):
    t = pl.program_id(1)
    qi = qs_ref[t]
    ki = ks_ref[t]

    @pl.when(ki == 0)
    def _():
        acc_ref[...] = jnp.zeros_like(acc_ref)

    q2d = q_ref[0]                                   # (tq, D) bf16
    k2d = k_ref[0]                                   # (tk, D) bf16
    v2d = v_ref[0]                                   # (tk, D) bf16
    r_iota = lax.broadcasted_iota(jnp.float32, (tq, 1), 0)   # row within q tile
    c_iota = lax.broadcasted_iota(jnp.float32, (tk, 1), 0)   # row within k tile

    def accumulate(is_diag):
        if is_diag:
            base = 0.0                                # same tile: exponent base 0
            rows = lax.broadcasted_iota(jnp.int32, (tq, tk), 0)
            cols = lax.broadcasted_iota(jnp.int32, (tq, tk), 1)
            tri = rows >= cols                        # causal mask, diag tile only
        else:
            # per-tile base exponent kept separate so gamma^(+r)/gamma^(-c) stay
            # in range; strictly-lower tiles need no mask.
            base = ((qi - ki) * tq).astype(jnp.float32)
        for h in range(num_heads):                    # one head live at a time
            lg = log_gammas[h]                        # compile-time constant
            lo = h * head_dim
            hi = lo + head_dim
            q_scale = jnp.exp((base + r_iota) * lg)   # (tq,1), <= 1
            k_scale = jnp.exp(-c_iota * lg)           # (tk,1), bounded by gamma^-(tk-1)
            qh = (q2d[:, lo:hi].astype(jnp.float32) * q_scale).astype(jnp.bfloat16)
            kh = (k2d[:, lo:hi].astype(jnp.float32) * k_scale).astype(jnp.bfloat16)
            sc = lax.dot_general(qh, kh, (((1,), (1,)), ((), ())),
                                 preferred_element_type=jnp.float32)  # (tq, tk)
            if is_diag:
                sc = jnp.where(tri, sc, 0.0)
            acc_ref[:, lo:hi] += jnp.dot(sc.astype(jnp.bfloat16), v2d[:, lo:hi],
                                         preferred_element_type=jnp.float32)

    @pl.when(ki < qi)
    def _():
        accumulate(False)

    @pl.when(ki == qi)                                # last kv tile for this qi
    def _():
        accumulate(True)
        o_ref[0] = acc_ref[...].astype(o_ref.dtype)


# ---- kernel C: swish gate -> out-proj -> residual -> LN2 -> FFN -> residual --

def gate_ffn_kernel(ret_ref, xo_ref, x_ref,
                    reto_w_ref, reto_b_ref, ln2_w_ref, ln2_b_ref,
                    w1_ref, b1_ref, w2_ref, b2_ref, o_ref):
    ret = ret_ref[0]                                               # (tq, D) f32
    xo = xo_ref[0]
    g = ret * (xo * jax.nn.sigmoid(xo))                            # swish gate
    y = jnp.dot(g.astype(jnp.bfloat16), reto_w_ref[...],
                preferred_element_type=jnp.float32) + reto_b_ref[...]
    x1 = x_ref[0] + y                                              # residual
    ln2 = _layernorm(x1, ln2_w_ref[...], ln2_b_ref[...])
    h1 = jnp.dot(ln2.astype(jnp.bfloat16), w1_ref[...],
                 preferred_element_type=jnp.float32) + b1_ref[...]
    h1 = jax.nn.gelu(h1, approximate=False)      # nn.GELU() default = exact erf
    ffn = jnp.dot(h1.astype(jnp.bfloat16), w2_ref[...],
                  preferred_element_type=jnp.float32) + b2_ref[...]
    o_ref[0] = (x1 + ffn).astype(o_ref.dtype)


def layernorm_kernel(x_ref, w_ref, b_ref, o_ref):
    o_ref[0] = _layernorm(x_ref[0], w_ref[...], b_ref[...])


# ----------------------------- wrappers --------------------------------------

def qkv_proj_call(x, ln1_w, ln1_b, proj_w, proj_b, *, d_model, tq, single_buffer):
    B, L, D = x.shape
    row = pl.BlockSpec((1, tq, D), lambda b, q: (b, q, 0))
    cm = lambda b, q: (0, 0)
    return pl.pallas_call(
        functools.partial(qkv_proj_kernel, d_model=d_model),
        out_shape=(jax.ShapeDtypeStruct((B, L, D), jnp.bfloat16),
                   jax.ShapeDtypeStruct((B, L, D), jnp.bfloat16),
                   jax.ShapeDtypeStruct((B, L, D), jnp.bfloat16),
                   jax.ShapeDtypeStruct((B, L, D), jnp.float32)),
        grid=(B, L // tq),
        in_specs=[row,
                  _const_spec((1, D), cm, single_buffer),          # ln1_w
                  _const_spec((1, D), cm, single_buffer),          # ln1_b
                  _const_spec((D, 4 * D), cm, single_buffer),      # proj_w (bf16)
                  _const_spec((1, 4 * D), cm, single_buffer)],     # proj_b
        out_specs=(row, row, row, row),
        compiler_params=pltpu.CompilerParams(
            dimension_semantics=("parallel", "parallel"),
            vmem_limit_bytes=VMEM_LIMIT),
    )(x, ln1_w, ln1_b, proj_w, proj_b)


def retention_call(q, k, v, log_gammas, *, num_heads, head_dim, tq):
    B, L, D = q.shape
    nq = L // tq
    # triangular enumeration of causal (qi, ki) tile pairs -> no dead grid steps
    qi_list, ki_list = [], []
    for qi in range(nq):
        for ki in range(qi + 1):
            qi_list.append(qi)
            ki_list.append(ki)
    qs_arr = jnp.asarray(np.asarray(qi_list, np.int32))
    ks_arr = jnp.asarray(np.asarray(ki_list, np.int32))
    n_steps = len(qi_list)

    kernel = functools.partial(retention_kernel, num_heads=num_heads,
                               head_dim=head_dim, tq=tq, tk=tq,
                               log_gammas=log_gammas)
    qspec = pl.BlockSpec((1, tq, D), lambda b, t, qs, ks: (b, qs[t], 0))
    kvspec = pl.BlockSpec((1, tq, D), lambda b, t, qs, ks: (b, ks[t], 0))
    ospec = pl.BlockSpec((1, tq, D), lambda b, t, qs, ks: (b, qs[t], 0))

    return pl.pallas_call(
        kernel,
        out_shape=jax.ShapeDtypeStruct((B, L, D), jnp.float32),
        grid_spec=pltpu.PrefetchScalarGridSpec(
            num_scalar_prefetch=2,
            grid=(B, n_steps),
            in_specs=[qspec, kvspec, kvspec],
            out_specs=ospec,
            scratch_shapes=[pltpu.VMEM((tq, D), jnp.float32)]),
        compiler_params=pltpu.CompilerParams(
            dimension_semantics=("parallel", "arbitrary"),
            vmem_limit_bytes=VMEM_LIMIT),
    )(qs_arr, ks_arr, q, k, v)


def gate_ffn_call(ret, xo, x, reto_w, reto_b, ln2_w, ln2_b, w1, b1, w2, b2,
                  *, d_ffn, tq, single_buffer):
    B, L, D = x.shape
    row = pl.BlockSpec((1, tq, D), lambda b, q: (b, q, 0))
    cm = lambda b, q: (0, 0)
    cs = lambda shape: _const_spec(shape, cm, single_buffer)
    return pl.pallas_call(
        gate_ffn_kernel,
        out_shape=jax.ShapeDtypeStruct((B, L, D), x.dtype),
        grid=(B, L // tq),
        in_specs=[row, row, row,                                   # ret, xo, x
                  cs((D, D)), cs((1, D)),                          # ret_o
                  cs((1, D)), cs((1, D)),                          # ln_2
                  cs((D, d_ffn)), cs((1, d_ffn)),                  # ffn.0
                  cs((d_ffn, D)), cs((1, D))],                     # ffn.2
        out_specs=row,
        compiler_params=pltpu.CompilerParams(
            dimension_semantics=("parallel", "parallel"),
            vmem_limit_bytes=VMEM_LIMIT),
    )(ret, xo, x, reto_w, reto_b, ln2_w, ln2_b, w1, b1, w2, b2)


def final_layernorm_call(x, w, b, *, tq, single_buffer):
    B, L, D = x.shape
    row = pl.BlockSpec((1, tq, D), lambda b_, q: (b_, q, 0))
    cm = lambda b_, q: (0, 0)
    return pl.pallas_call(
        layernorm_kernel,
        out_shape=jax.ShapeDtypeStruct((B, L, D), x.dtype),
        grid=(B, L // tq),
        in_specs=[row, _const_spec((1, D), cm, single_buffer),
                  _const_spec((1, D), cm, single_buffer)],
        out_specs=row,
        compiler_params=pltpu.CompilerParams(
            dimension_semantics=("parallel", "parallel"),
            vmem_limit_bytes=VMEM_LIMIT),
    )(x, w, b)


def retnet_block_call(x, log_gammas, params, *, num_heads, head_dim, d_model,
                      d_ffn, tq, single_buffer):
    (ln1_w, ln1_b, proj_w, proj_b, reto_w, reto_b,
     ln2_w, ln2_b, w1, b1, w2, b2) = params
    q, k, v, xo = qkv_proj_call(x, ln1_w, ln1_b, proj_w, proj_b,
                                d_model=d_model, tq=tq, single_buffer=single_buffer)
    ret = retention_call(q, k, v, log_gammas, num_heads=num_heads,
                         head_dim=head_dim, tq=tq)
    return gate_ffn_call(ret, xo, x, reto_w, reto_b, ln2_w, ln2_b, w1, b1, w2, b2,
                         d_ffn=d_ffn, tq=tq, single_buffer=single_buffer)


def retnet_forward(x, layer_params, ln_f_w, ln_f_b, *,
                   num_heads, head_dim, d_model, d_ffn):
    B, L, D = x.shape
    tq = _pick_tq(L)
    assert L % tq == 0
    # gamma_n = 1 - 2^(-5-n) only depends on num_heads -> compile-time constants
    gamma = 1.0 - 2.0 ** (-5.0 - np.arange(num_heads, dtype=np.float64))
    log_gammas = tuple(float(np.log(g)) for g in gamma)

    def run(single_buffer):
        y = x
        for p in layer_params:
            y = retnet_block_call(y, log_gammas, p, num_heads=num_heads,
                                  head_dim=head_dim, d_model=d_model,
                                  d_ffn=d_ffn, tq=tq, single_buffer=single_buffer)
        y = final_layernorm_call(y, ln_f_w, ln_f_b, tq=tq,
                                 single_buffer=single_buffer)
        return jax.block_until_ready(y)

    try:
        return run(True)
    except Exception:
        # TODO(synk): pl.Buffered(1) single-buffering not supported on this JAX
        # version; fall back to default double-buffered weight specs.
        return run(False)


# ------------------------- params / reference --------------------------------

def _xavier(key, fan_in, fan_out, dtype=jnp.bfloat16):
    a = float(np.sqrt(6.0 / (fan_in + fan_out)))
    return jax.random.uniform(key, (fan_in, fan_out), jnp.float32, -a, a).astype(dtype)


def init_layer_params(key, D, d_ffn):
    ks = jax.random.split(key, 4)
    return (
        jnp.ones((1, D), jnp.float32), jnp.zeros((1, D), jnp.float32),        # ln_1
        _xavier(ks[0], D, 4 * D), jnp.zeros((1, 4 * D), jnp.float32),         # proj
        _xavier(ks[1], D, D), jnp.zeros((1, D), jnp.float32),                 # ret_o
        jnp.ones((1, D), jnp.float32), jnp.zeros((1, D), jnp.float32),        # ln_2
        _xavier(ks[2], D, d_ffn), jnp.zeros((1, d_ffn), jnp.float32),         # ffn.0
        _xavier(ks[3], d_ffn, D), jnp.zeros((1, D), jnp.float32),             # ffn.2
    )


def block_reference(x, decay, params, num_heads, head_dim, d_model):
    (ln1_w, ln1_b, proj_w, proj_b, reto_w, reto_b,
     ln2_w, ln2_b, w1, b1, w2, b2) = [jnp.asarray(p, jnp.float32) for p in params]
    B, L, _ = x.shape
    ln_x = _layernorm(x, ln1_w, ln1_b)
    p = ln_x @ proj_w + proj_b
    q, k, v, xo = jnp.split(p, 4, axis=-1)
    qh = q.reshape(B, L, num_heads, head_dim)
    kh = k.reshape(B, L, num_heads, head_dim)
    vh = v.reshape(B, L, num_heads, head_dim)
    sc = jnp.einsum('blnd,bmnd->bnlm', qh, kh) * decay[None]
    ret = jnp.einsum('bnlm,bmnd->blnd', sc, vh).reshape(B, L, d_model)
    ret = ret * (xo * jax.nn.sigmoid(xo))
    ret = ret @ reto_w + reto_b
    x1 = x + ret
    ln2 = _layernorm(x1, ln2_w, ln2_b)
    h1 = jax.nn.gelu(ln2 @ w1 + b1, approximate=False)
    return x1 + (h1 @ w2 + b2)


def retnet_reference(x, decay, layer_params, ln_f_w, ln_f_b,
                     num_heads, head_dim, d_model):
    for p in layer_params:
        x = block_reference(x, decay, p, num_heads, head_dim, d_model)
    return _layernorm(x, ln_f_w, ln_f_b)


# --------------------------------- main ---------------------------------------

if __name__ == "__main__":
    B, L, D = 2, 8, 32
    N_HEADS, N_LAYERS = 4, 2
    D_FFN = 4 * D                     # d_ffn=0 in the module -> 4 * d_model
    HEAD_DIM = D // N_HEADS

    key = jax.random.PRNGKey(0)
    key, xkey = jax.random.split(key)
    x = jax.random.normal(xkey, (B, L, D), jnp.float32)

    # dense decay only for the pure-JAX reference
    gamma = 1.0 - 2.0 ** (-5.0 - jnp.arange(N_HEADS, dtype=jnp.float32))
    i = jnp.arange(L, dtype=jnp.float32)[:, None]
    j = jnp.arange(L, dtype=jnp.float32)[None, :]
    decay = jnp.where(i >= j, gamma[:, None, None] ** (i - j), 0.0).astype(jnp.float32)

    layer_params = []
    for _ in range(N_LAYERS):
        key, lk = jax.random.split(key)
        layer_params.append(init_layer_params(lk, D, D_FFN))
    ln_f_w = jnp.ones((1, D), jnp.float32)
    ln_f_b = jnp.zeros((1, D), jnp.float32)

    out = retnet_forward(x, layer_params, ln_f_w, ln_f_b,
                         num_heads=N_HEADS, head_dim=HEAD_DIM,
                         d_model=D, d_ffn=D_FFN)
    out = jax.block_until_ready(out)

    ref = retnet_reference(x, decay, layer_params, ln_f_w, ln_f_b,
                           N_HEADS, HEAD_DIM, D)
    np.testing.assert_allclose(np.asarray(out), np.asarray(ref),
                               rtol=3e-2, atol=3e-2)
    assert out.shape == (B, L, D)
    print("KERNEL_OK")
</pallas_src>

<mosaic_0001>
module attributes {stable_mosaic.version = 11 : i64} {
  func.func @qkv_proj_kernel(%arg0: i32, %arg1: i32, %arg2: memref<1x8x32xf32, #tpu.memory_space<vmem>>, %arg3: memref<1x32xf32, #tpu.memory_space<vmem>>, %arg4: memref<1x32xf32, #tpu.memory_space<vmem>>, %arg5: memref<32x128xbf16, #tpu.memory_space<vmem>>, %arg6: memref<1x128xf32, #tpu.memory_space<vmem>>, %arg7: memref<1x8x32xbf16, #tpu.memory_space<vmem>>, %arg8: memref<1x8x32xbf16, #tpu.memory_space<vmem>>, %arg9: memref<1x8x32xbf16, #tpu.memory_space<vmem>>, %arg10: memref<1x8x32xf32, #tpu.memory_space<vmem>>) attributes {dimension_semantics = [#tpu.dimension_semantics<parallel>, #tpu.dimension_semantics<parallel>], iteration_bounds = array<i64: 2, 1>, scalar_prefetch = 0 : i64, scratch_operands = 0 : i64, tpu.core_type = #tpu.core_type<tc>, window_params = [{transform_indices = @transform_0, window_bounds = array<i64: 1, 8, 32>}, {pipeline_mode = #tpu.pipeline_mode<synchronous>, transform_indices = @transform_1, window_bounds = array<i64: 1, 32>}, {pipeline_mode = #tpu.pipeline_mode<synchronous>, transform_indices = @transform_2, window_bounds = array<i64: 1, 32>}, {pipeline_mode = #tpu.pipeline_mode<synchronous>, transform_indices = @transform_3, window_bounds = array<i64: 32, 128>}, {pipeline_mode = #tpu.pipeline_mode<synchronous>, transform_indices = @transform_4, window_bounds = array<i64: 1, 128>}, {transform_indices = @transform_5, window_bounds = array<i64: 1, 8, 32>}, {transform_indices = @transform_6, window_bounds = array<i64: 1, 8, 32>}, {transform_indices = @transform_7, window_bounds = array<i64: 1, 8, 32>}, {transform_indices = @transform_8, window_bounds = array<i64: 1, 8, 32>}]} {
    %c0 = arith.constant 0 : index
    %c0_0 = arith.constant 0 : index
    %c0_1 = arith.constant 0 : index
    %0 = vector.load %arg2[%c0, %c0_0, %c0_1] : memref<1x8x32xf32, #tpu.memory_space<vmem>>, vector<1x8x32xf32>
    %1 = vector.shape_cast %0 : vector<1x8x32xf32> to vector<8x32xf32>
    %c0_2 = arith.constant 0 : index
    %c0_3 = arith.constant 0 : index
    %2 = vector.load %arg3[%c0_2, %c0_3] : memref<1x32xf32, #tpu.memory_space<vmem>>, vector<1x32xf32>
    %c0_4 = arith.constant 0 : index
    %c0_5 = arith.constant 0 : index
    %3 = vector.load %arg4[%c0_4, %c0_5] : memref<1x32xf32, #tpu.memory_space<vmem>>, vector<1x32xf32>
    %cst = arith.constant dense<0.000000e+00> : vector<8xf32>
    %4 = vector.multi_reduction <add>, %1, %cst [1] : vector<8x32xf32> to vector<8xf32>
    %5 = vector.shape_cast %4 : vector<8xf32> to vector<8x1xf32>
    %cst_6 = arith.constant 3.200000e+01 : f32
    %6 = vector.broadcast %cst_6 : f32 to vector<8x1xf32>
    %7 = arith.divf %5, %6 : vector<8x1xf32>
    %8 = vector.broadcast %7 : vector<8x1xf32> to vector<8x32xf32>
    %9 = arith.subf %1, %8 : vector<8x32xf32>
    %10 = arith.mulf %9, %9 : vector<8x32xf32>
    %cst_7 = arith.constant dense<0.000000e+00> : vector<8xf32>
    %11 = vector.multi_reduction <add>, %10, %cst_7 [1] : vector<8x32xf32> to vector<8xf32>
    %12 = vector.shape_cast %11 : vector<8xf32> to vector<8x1xf32>
    %cst_8 = arith.constant 3.200000e+01 : f32
    %13 = vector.broadcast %cst_8 : f32 to vector<8x1xf32>
    %14 = arith.divf %12, %13 : vector<8x1xf32>
    %15 = vector.broadcast %7 : vector<8x1xf32> to vector<8x32xf32>
    %16 = arith.subf %1, %15 : vector<8x32xf32>
    %cst_9 = arith.constant 9.99999974E-6 : f32
    %17 = vector.broadcast %cst_9 : f32 to vector<8x1xf32>
    %18 = arith.addf %14, %17 : vector<8x1xf32>
    %19 = math.rsqrt %18 : vector<8x1xf32>
    %20 = vector.broadcast %19 : vector<8x1xf32> to vector<8x32xf32>
    %21 = arith.mulf %16, %20 : vector<8x32xf32>
    %22 = vector.broadcast %2 : vector<1x32xf32> to vector<8x32xf32>
    %23 = arith.mulf %21, %22 : vector<8x32xf32>
    %24 = vector.broadcast %3 : vector<1x32xf32> to vector<8x32xf32>
    %25 = arith.addf %23, %24 : vector<8x32xf32>
    %26 = arith.truncf %25 : vector<8x32xf32> to vector<8x32xbf16>
    %c0_10 = arith.constant 0 : index
    %c0_11 = arith.constant 0 : index
    %27 = vector.load %arg5[%c0_10, %c0_11] : memref<32x128xbf16, #tpu.memory_space<vmem>>, vector<32x128xbf16>
    %cst_12 = arith.constant dense<0.000000e+00> : vector<8x128xf32>
    %28 = tpu.matmul %26, %27, %cst_12 {dimension_numbers = #tpu.dot_dimension_numbers<[1], [0], [0], [1], [0, 0, 1, 1], [], []>} : vector<8x32xbf16>, vector<32x128xbf16>, vector<8x128xf32> -> vector<8x128xf32>
    %c0_13 = arith.constant 0 : index
    %c0_14 = arith.constant 0 : index
    %29 = vector.load %arg6[%c0_13, %c0_14] : memref<1x128xf32, #tpu.memory_space<vmem>>, vector<1x128xf32>
    %30 = vector.broadcast %29 : vector<1x128xf32> to vector<8x128xf32>
    %31 = arith.addf %28, %30 : vector<8x128xf32>
    %32 = vector.extract_strided_slice %31 {offsets = [0, 0], sizes = [8, 32], strides = [1, 1]} : vector<8x128xf32> to vector<8x32xf32>
    %33 = arith.truncf %32 : vector<8x32xf32> to vector<8x32xbf16>
    %c0_15 = arith.constant 0 : index
    %c0_16 = arith.constant 0 : index
    %c0_17 = arith.constant 0 : index
    %34 = vector.load %arg7[%c0_15, %c0_16, %c0_17] : memref<1x8x32xbf16, #tpu.memory_space<vmem>>, vector<1x8x32xbf16>
    %35 = vector.shape_cast %34 : vector<1x8x32xbf16> to vector<8x32xbf16>
    %36 = vector.shape_cast %33 : vector<8x32xbf16> to vector<1x8x32xbf16>
    tpu.vector_store %arg7[%c0_15, %c0_16, %c0_17], %36 {strides = array<i32>} : memref<1x8x32xbf16, #tpu.memory_space<vmem>>, vector<1x8x32xbf16>,
    %37 = vector.extract_strided_slice %31 {offsets = [0, 32], sizes = [8, 32], strides = [1, 1]} : vector<8x128xf32> to vector<8x32xf32>
    %38 = arith.truncf %37 : vector<8x32xf32> to vector<8x32xbf16>
    %c0_18 = arith.constant 0 : index
    %c0_19 = arith.constant 0 : index
    %c0_20 = arith.constant 0 : index
    %39 = vector.load %arg8[%c0_18, %c0_19, %c0_20] : memref<1x8x32xbf16, #tpu.memory_space<vmem>>, vector<1x8x32xbf16>
    %40 = vector.shape_cast %39 : vector<1x8x32xbf16> to vector<8x32xbf16>
    %41 = vector.shape_cast %38 : vector<8x32xbf16> to vector<1x8x32xbf16>
    tpu.vector_store %arg8[%c0_18, %c0_19, %c0_20], %41 {strides = array<i32>} : memref<1x8x32xbf16, #tpu.memory_space<vmem>>, vector<1x8x32xbf16>,
    %42 = vector.extract_strided_slice %31 {offsets = [0, 64], sizes = [8, 32], strides = [1, 1]} : vector<8x128xf32> to vector<8x32xf32>
    %43 = arith.truncf %42 : vector<8x32xf32> to vector<8x32xbf16>
    %c0_21 = arith.constant 0 : index
    %c0_22 = arith.constant 0 : index
    %c0_23 = arith.constant 0 : index
    %44 = vector.load %arg9[%c0_21, %c0_22, %c0_23] : memref<1x8x32xbf16, #tpu.memory_space<vmem>>, vector<1x8x32xbf16>
    %45 = vector.shape_cast %44 : vector<1x8x32xbf16> to vector<8x32xbf16>
    %46 = vector.shape_cast %43 : vector<8x32xbf16> to vector<1x8x32xbf16>
    tpu.vector_store %arg9[%c0_21, %c0_22, %c0_23], %46 {strides = array<i32>} : memref<1x8x32xbf16, #tpu.memory_space<vmem>>, vector<1x8x32xbf16>,
    %47 = vector.extract_strided_slice %31 {offsets = [0, 96], sizes = [8, 32], strides = [1, 1]} : vector<8x128xf32> to vector<8x32xf32>
    %c0_24 = arith.constant 0 : index
    %c0_25 = arith.constant 0 : index
    %c0_26 = arith.constant 0 : index
    %48 = vector.load %arg10[%c0_24, %c0_25, %c0_26] : memref<1x8x32xf32, #tpu.memory_space<vmem>>, vector<1x8x32xf32>
    %49 = vector.shape_cast %48 : vector<1x8x32xf32> to vector<8x32xf32>
    %50 = vector.shape_cast %47 : vector<8x32xf32> to vector<1x8x32xf32>
    tpu.vector_store %arg10[%c0_24, %c0_25, %c0_26], %50 {strides = array<i32>} : memref<1x8x32xf32, #tpu.memory_space<vmem>>, vector<1x8x32xf32>,
    return
  }
  func.func @transform_0(%arg0: i32, %arg1: i32) -> (i32, i32, i32) {
    %c0_i32 = arith.constant 0 : i32
    %c0_i32_0 = arith.constant 0 : i32
    return %arg0, %arg1, %c0_i32 : i32, i32, i32
  }
  func.func @transform_1(%arg0: i32, %arg1: i32) -> (i32, i32) {
    %c0_i32 = arith.constant 0 : i32
    %c0_i32_0 = arith.constant 0 : i32
    %c0_i32_1 = arith.constant 0 : i32
    return %c0_i32, %c0_i32_0 : i32, i32
  }
  func.func @transform_2(%arg0: i32, %arg1: i32) -> (i32, i32) {
    %c0_i32 = arith.constant 0 : i32
    %c0_i32_0 = arith.constant 0 : i32
    %c0_i32_1 = arith.constant 0 : i32
    return %c0_i32, %c0_i32_0 : i32, i32
  }
  func.func @transform_3(%arg0: i32, %arg1: i32) -> (i32, i32) {
    %c0_i32 = arith.constant 0 : i32
    %c0_i32_0 = arith.constant 0 : i32
    %c0_i32_1 = arith.constant 0 : i32
    return %c0_i32, %c0_i32_0 : i32, i32
  }
  func.func @transform_4(%arg0: i32, %arg1: i32) -> (i32, i32) {
    %c0_i32 = arith.constant 0 : i32
    %c0_i32_0 = arith.constant 0 : i32
    %c0_i32_1 = arith.constant 0 : i32
    return %c0_i32, %c0_i32_0 : i32, i32
  }
  func.func @transform_5(%arg0: i32, %arg1: i32) -> (i32, i32, i32) {
    %c0_i32 = arith.constant 0 : i32
    %c0_i32_0 = arith.constant 0 : i32
    return %arg0, %arg1, %c0_i32 : i32, i32, i32
  }
  func.func @transform_6(%arg0: i32, %arg1: i32) -> (i32, i32, i32) {
    %c0_i32 = arith.constant 0 : i32
    %c0_i32_0 = arith.constant 0 : i32
    return %arg0, %arg1, %c0_i32 : i32, i32, i32
  }
  func.func @transform_7(%arg0: i32, %arg1: i32) -> (i32, i32, i32) {
    %c0_i32 = arith.constant 0 : i32
    %c0_i32_0 = arith.constant 0 : i32
    return %arg0, %arg1, %c0_i32 : i32, i32, i32
  }
  func.func @transform_8(%arg0: i32, %arg1: i32) -> (i32, i32, i32) {
    %c0_i32 = arith.constant 0 : i32
    %c0_i32_0 = arith.constant 0 : i32
    return %arg0, %arg1, %c0_i32 : i32, i32, i32
  }
}

module attributes {stable_mosaic.version = 11 : i64} {
  func.func @qkv_proj_kernel(%arg0: i32, %arg1: i32, %arg2: memref<1x8x32xf32, #tpu.memory_space<vmem>>, %arg3: memref<1x32xf32, #tpu.memory_space<vmem>>, %arg4: memref<1x32xf32, #tpu.memory_space<vmem>>, %arg5: memref<32x128xbf16, #tpu.memory_space<vmem>>, %arg6: memref<1x128xf32, #tpu.memory_space<vmem>>, %arg7: memref<1x8x32xbf16, #tpu.memory_space<vmem>>, %arg8: memref<1x8x32xbf16, #tpu.memory_space<vmem>>, %arg9: memref<1x8x32xbf16, #tpu.memory_space<vmem>>, %arg10: memref<1x8x32xf32, #tpu.memory_space<vmem>>) attributes {dimension_semantics = [#tpu.dimension_semantics<parallel>, #tpu.dimension_semantics<parallel>], iteration_bounds = array<i64: 2, 1>, scalar_prefetch = 0 : i64, scratch_operands = 0 : i64, tpu.core_type = #tpu.core_type<tc>, window_params = [{transform_indices = @transform_0, window_bounds = array<i64: 1, 8, 32>}, {pipeline_mode = #tpu.pipeline_mode<synchronous>, transform_indices = @transform_1, window_bounds = array<i64: 1, 32>}, {pipeline_mode = #tpu.pipeline_mode<synchronous>, transform_indices = @transform_2, window_bounds = array<i64: 1, 32>}, {pipeline_mode = #tpu.pipeline_mode<synchronous>, transform_indices = @transform_3, window_bounds = array<i64: 32, 128>}, {pipeline_mode = #tpu.pipeline_mode<synchronous>, transform_indices = @transform_4, window_bounds = array<i64: 1, 128>}, {transform_indices = @transform_5, window_bounds = array<i64: 1, 8, 32>}, {transform_indices = @transform_6, window_bounds = array<i64: 1, 8, 32>}, {transform_indices = @transform_7, window_bounds = array<i64: 1, 8, 32>}, {transform_indices = @transform_8, window_bounds = array<i64: 1, 8, 32>}]} {
    %c0 = arith.constant 0 : index
    %c0_0 = arith.constant 0 : index
    %c0_1 = arith.constant 0 : index
    %0 = vector.load %arg2[%c0, %c0_0, %c0_1] : memref<1x8x32xf32, #tpu.memory_space<vmem>>, vector<1x8x32xf32>
    %1 = vector.shape_cast %0 : vector<1x8x32xf32> to vector<8x32xf32>
    %c0_2 = arith.constant 0 : index
    %c0_3 = arith.constant 0 : index
    %2 = vector.load %arg3[%c0_2, %c0_3] : memref<1x32xf32, #tpu.memory_space<vmem>>, vector<1x32xf32>
    %c0_4 = arith.constant 0 : index
    %c0_5 = arith.constant 0 : index
    %3 = vector.load %arg4[%c0_4, %c0_5] : memref<1x32xf32, #tpu.memory_space<vmem>>, vector<1x32xf32>
    %cst = arith.constant dense<0.000000e+00> : vector<8xf32>
    %4 = vector.multi_reduction <add>, %1, %cst [1] : vector<8x32xf32> to vector<8xf32>
    %5 = vector.shape_cast %4 : vector<8xf32> to vector<8x1xf32>
    %cst_6 = arith.constant 3.200000e+01 : f32
    %6 = vector.broadcast %cst_6 : f32 to vector<8x1xf32>
    %7 = arith.divf %5, %6 : vector<8x1xf32>
    %8 = vector.broadcast %7 : vector<8x1xf32> to vector<8x32xf32>
    %9 = arith.subf %1, %8 : vector<8x32xf32>
    %10 = arith.mulf %9, %9 : vector<8x32xf32>
    %cst_7 = arith.constant dense<0.000000e+00> : vector<8xf32>
    %11 = vector.multi_reduction <add>, %10, %cst_7 [1] : vector<8x32xf32> to vector<8xf32>
    %12 = vector.shape_cast %11 : vector<8xf32> to vector<8x1xf32>
    %cst_8 = arith.constant 3.200000e+01 : f32
    %13 = vector.broadcast %cst_8 : f32 to vector<8x1xf32>
    %14 = arith.divf %12, %13 : vector<8x1xf32>
    %15 = vector.broadcast %7 : vector<8x1xf32> to vector<8x32xf32>
    %16 = arith.subf %1, %15 : vector<8x32xf32>
    %cst_9 = arith.constant 9.99999974E-6 : f32
    %17 = vector.broadcast %cst_9 : f32 to vector<8x1xf32>
    %18 = arith.addf %14, %17 : vector<8x1xf32>
    %19 = math.rsqrt %18 : vector<8x1xf32>
    %20 = vector.broadcast %19 : vector<8x1xf32> to vector<8x32xf32>
    %21 = arith.mulf %16, %20 : vector<8x32xf32>
    %22 = vector.broadcast %2 : vector<1x32xf32> to vector<8x32xf32>
    %23 = arith.mulf %21, %22 : vector<8x32xf32>
    %24 = vector.broadcast %3 : vector<1x32xf32> to vector<8x32xf32>
    %25 = arith.addf %23, %24 : vector<8x32xf32>
    %26 = arith.truncf %25 : vector<8x32xf32> to vector<8x32xbf16>
    %c0_10 = arith.constant 0 : index
    %c0_11 = arith.constant 0 : index
    %27 = vector.load %arg5[%c0_10, %c0_11] : memref<32x128xbf16, #tpu.memory_space<vmem>>, vector<32x128xbf16>
    %cst_12 = arith.constant dense<0.000000e+00> : vector<8x128xf32>
    %28 = tpu.matmul %26, %27, %cst_12 {dimension_numbers = #tpu.dot_dimension_numbers<[1], [0], [0], [1], [0, 0, 1, 1], [], []>} : vector<8x32xbf16>, vector<32x128xbf16>, vector<8x128xf32> -> vector<8x128xf32>
    %c0_13 = arith.constant 0 : index
    %c0_14 = arith.constant 0 : index
    %29 = vector.load %arg6[%c0_13, %c0_14] : memref<1x128xf32, #tpu.memory_space<vmem>>, vector<1x128xf32>
    %30 = vector.broadcast %29 : vector<1x128xf32> to vector<8x128xf32>
    %31 = arith.addf %28, %30 : vector<8x128xf32>
    %32 = vector.extract_strided_slice %31 {offsets = [0, 0], sizes = [8, 32], strides = [1, 1]} : vector<8x128xf32> to vector<8x32xf32>
    %33 = arith.truncf %32 : vector<8x32xf32> to vector<8x32xbf16>
    %c0_15 = arith.constant 0 : index
    %c0_16 = arith.constant 0 : index
    %c0_17 = arith.constant 0 : index
    %34 = vector.load %arg7[%c0_15, %c0_16, %c0_17] : memref<1x8x32xbf16, #tpu.memory_space<vmem>>, vector<1x8x32xbf16>
    %35 = vector.shape_cast %34 : vector<1x8x32xbf16> to vector<8x32xbf16>
    %36 = vector.shape_cast %33 : vector<8x32xbf16> to vector<1x8x32xbf16>
    tpu.vector_store %arg7[%c0_15, %c0_16, %c0_17], %36 {strides = array<i32>} : memref<1x8x32xbf16, #tpu.memory_space<vmem>>, vector<1x8x32xbf16>,
    %37 = vector.extract_strided_slice %31 {offsets = [0, 32], sizes = [8, 32], strides = [1, 1]} : vector<8x128xf32> to vector<8x32xf32>
    %38 = arith.truncf %37 : vector<8x32xf32> to vector<8x32xbf16>
    %c0_18 = arith.constant 0 : index
    %c0_19 = arith.constant 0 : index
    %c0_20 = arith.constant 0 : index
    %39 = vector.load %arg8[%c0_18, %c0_19, %c0_20] : memref<1x8x32xbf16, #tpu.memory_space<vmem>>, vector<1x8x32xbf16>
    %40 = vector.shape_cast %39 : vector<1x8x32xbf16> to vector<8x32xbf16>
    %41 = vector.shape_cast %38 : vector<8x32xbf16> to vector<1x8x32xbf16>
    tpu.vector_store %arg8[%c0_18, %c0_19, %c0_20], %41 {strides = array<i32>} : memref<1x8x32xbf16, #tpu.memory_space<vmem>>, vector<1x8x32xbf16>,
    %42 = vector.extract_strided_slice %31 {offsets = [0, 64], sizes = [8, 32], strides = [1, 1]} : vector<8x128xf32> to vector<8x32xf32>
    %43 = arith.truncf %42 : vector<8x32xf32> to vector<8x32xbf16>
    %c0_21 = arith.constant 0 : index
    %c0_22 = arith.constant 0 : index
    %c0_23 = arith.constant 0 : index
    %44 = vector.load %arg9[%c0_21, %c0_22, %c0_23] : memref<1x8x32xbf16, #tpu.memory_space<vmem>>, vector<1x8x32xbf16>
    %45 = vector.shape_cast %44 : vector<1x8x32xbf16> to vector<8x32xbf16>
    %46 = vector.shape_cast %43 : vector<8x32xbf16> to vector<1x8x32xbf16>
    tpu.vector_store %arg9[%c0_21, %c0_22, %c0_23], %46 {strides = array<i32>} : memref<1x8x32xbf16, #tpu.memory_space<vmem>>, vector<1x8x32xbf16>,
    %47 = vector.extract_strided_slice %31 {offsets = [0, 96], sizes = [8, 32], strides = [1, 1]} : vector<8x128xf32> to vector<8x32xf32>
    %c0_24 = arith.constant 0 : index
    %c0_25 = arith.constant 0 : index
    %c0_26 = arith.constant 0 : index
    %48 = vector.load %arg10[%c0_24, %c0_25, %c0_26] : memref<1x8x32xf32, #tpu.memory_space<vmem>>, vector<1x8x32xf32>
    %49 = vector.shape_cast %48 : vector<1x8x32xf32> to vector<8x32xf32>
    %50 = vector.shape_cast %47 : vector<8x32xf32> to vector<1x8x32xf32>
    tpu.vector_store %arg10[%c0_24, %c0_25, %c0_26], %50 {strides = array<i32>} : memref<1x8x32xf32, #tpu.memory_space<vmem>>, vector<1x8x32xf32>,
    return
  }
  func.func @transform_0(%arg0: i32, %arg1: i32) -> (i32, i32, i32) {
    %c0_i32 = arith.constant 0 : i32
    %c0_i32_0 = arith.constant 0 : i32
    return %arg0, %arg1, %c0_i32 : i32, i32, i32
  }
  func.func @transform_1(%arg0: i32, %arg1: i32) -> (i32, i32) {
    %c0_i32 = arith.constant 0 : i32
    %c0_i32_0 = arith.constant 0 : i32
    %c0_i32_1 = arith.constant 0 : i32
    return %c0_i32, %c0_i32_0 : i32, i32
  }
  func.func @transform_2(%arg0: i32, %arg1: i32) -> (i32, i32) {
    %c0_i32 = arith.constant 0 : i32
    %c0_i32_0 = arith.constant 0 : i32
    %c0_i32_1 = arith.constant 0 : i32
    return %c0_i32, %c0_i32_0 : i32, i32
  }
  func.func @transform_3(%arg0: i32, %arg1: i32) -> (i32, i32) {
    %c0_i32 = arith.constant 0 : i32
    %c0_i32_0 = arith.constant 0 : i32
    %c0_i32_1 = arith.constant 0 : i32
    return %c0_i32, %c0_i32_0 : i32, i32
  }
  func.func @transform_4(%arg0: i32, %arg1: i32) -> (i32, i32) {
    %c0_i32 = arith.constant 0 : i32
    %c0_i32_0 = arith.constant 0 : i32
    %c0_i32_1 = arith.constant 0 : i32
    return %c0_i32, %c0_i32_0 : i32, i32
  }
  func.func @transform_5(%arg0: i32, %arg1: i32) -> (i32, i32, i32) {
    %c0_i32 = arith.constant 0 : i32
    %c0_i32_0 = arith.constant 0 : i32
    return %arg0, %arg1, %c0_i32 : i32, i32, i32
  }
  func.func @transform_6(%arg0: i32, %arg1: i32) -> (i32, i32, i32) {
    %c0_i32 = arith.constant 0 : i32
    %c0_i32_0 = arith.constant 0 : i32
    return %arg0, %arg1, %c0_i32 : i32, i32, i32
  }
  func.func @transform_7(%arg0: i32, %arg1: i32) -> (i32, i32, i32) {
    %c0_i32 = arith.constant 0 : i32
    %c0_i32_0 = arith.constant 0 : i32
    return %arg0, %arg1, %c0_i32 : i32, i32, i32
  }
  func.func @transform_8(%arg0: i32, %arg1: i32) -> (i32, i32, i32) {
    %c0_i32 = arith.constant 0 : i32
    %c0_i32_0 = arith.constant 0 : i32
    return %arg0, %arg1, %c0_i32 : i32, i32, i32
  }
}

</mosaic_0001>

<llo_original>
// kernel: tpu_custom_call.1
$region0: #{tpu_custom_call.1}
  #allocation0 [shape = 'u32[]', space=smem, size = 0x4, offset = 0x4, fixed_abs, tag = 'smem constant byte address 0x4 - core index']
  #allocation1 [shape = 'u32[144,128]{1,0:T(1,128)}', space=vmem, size = 0x12000, scoped, tag = 'internal scratch']
  %s0 = inlined_call_operand.hbm [shape: f32[2,8,32], index: 0, kind: input, shape index: {}]
  %s1 = inlined_call_operand.vmem [shape: f32[1,32], index: 1, kind: input, shape index: {}]
  %s2 = inlined_call_operand.vmem [shape: f32[1,32], index: 2, kind: input, shape index: {}]
  %s3 = inlined_call_operand.hbm [shape: bf16[32,128], index: 3, kind: input, shape index: {}]
  %s4 = inlined_call_operand.vmem [shape: f32[1,128], index: 4, kind: input, shape index: {}]
  %s5 = inlined_call_operand.hbm [shape: bf16[2,8,32], index: 5, kind: output, shape index: {0}]
  %s6 = inlined_call_operand.hbm [shape: bf16[2,8,32], index: 6, kind: output, shape index: {1}]
  %s7 = inlined_call_operand.hbm [shape: bf16[2,8,32], index: 7, kind: output, shape index: {2}]
  %s8 = inlined_call_operand.hbm [shape: f32[2,8,32], index: 8, kind: output, shape index: {3}]
  %9 = xla_tuple %s5, %s6, %s7, %s8
  %s10 = sld [smem:[#allocation0]]
  $region85: #{tpu_custom_call.1} parent=0
    _
  %s12 = ssub.s32 1, %s10
  %s13 = scalar_select 0, %s12, %s10
  $region1: #{tpu_custom_call.1} parent=0
    #allocation2 [shape = 'u8[8192]{0}', space=vmem, size = 0x2000, scoped, tag = 'input window, operand 0']
    #allocation3 [shape = 's32[2]{0}', space=sflag, size = 0x8, scoped, tag = 'scoped memory for tpu_custom_call.1']
    #allocation4 [shape = 's32[2]{0}', space=sflag, size = 0x8, scoped, tag = 'scoped memory for tpu_custom_call.1']
    #allocation5 [shape = 'u8[8192]{0}', space=vmem, size = 0x2000, scoped, tag = 'input window, operand 3, single buffered']
    #allocation6 [shape = 's32[1]{0}', space=sflag, size = 0x4, scoped, tag = 'scoped memory for tpu_custom_call.1']
    #allocation7 [shape = 'u8[4096]{0}', space=vmem, size = 0x1000, scoped, tag = 'output window, operand 0']
    #allocation8 [shape = 'u8[4096]{0}', space=vmem, size = 0x1000, scoped, tag = 'output window, operand 1']
    #allocation9 [shape = 's32[2]{0}', space=sflag, size = 0x8, scoped, tag = 'scoped memory for tpu_custom_call.1']
    #allocation10 [shape = 'u8[4096]{0}', space=vmem, size = 0x1000, scoped, tag = 'output window, operand 2']
    #allocation11 [shape = 'u8[8192]{0}', space=vmem, size = 0x2000, scoped, tag = 'output window, operand 3']
    #allocation12 [shape = 's32[2]{0}', space=sflag, size = 0x8, scoped, tag = 'scoped memory for tpu_custom_call.1']
    %14 = vsyncpa [#allocation3], 0
    %s15 = scalar_lea.sflag [#allocation3], 1
    %16 = vsyncpa %s15, 0
    %17 = vsyncpa [#allocation6], 0
    %18 = vsyncpa [#allocation4], 0
    %s19 = scalar_lea.sflag [#allocation4], 1
    %20 = vsyncpa %s19, 0
    %21 = vsyncpa [#allocation9], 0
    %s22 = scalar_lea.sflag [#allocation9], 1
    %23 = vsyncpa %s22, 0
    %24 = vsyncpa [#allocation12], 0
    %s25 = scalar_lea.sflag [#allocation12], 1
    %26 = vsyncpa %s25, 0
    loop: start=0, step=1, limit=4
    $region2: #{tpu_custom_call.1} parent=1 // loop_pre_header
      _
    $region3: #{tpu_custom_call.1} parent=1 // loop_header
      %s28 = sphi 0, %s32
      %p29 = scmp.ge.s32.totalorder %s28, 4
      %s35 = sphi 0, %s47
      %s36 = sphi 0, %s43
      %s37 = sphi 0, %s35
      %s38 = sphi 0, %s36
      %s39 = sphi 0, %s37
      %s40 = sphi 0, %s38
      %s52 = sphi 0, %s54
      %s55 = sphi 0, %s52
      %s56 = sphi 0, %s55
      %s72 = sphi 0, %s56
      %s76 = sphi 0, %s76
      %s78 = sphi 0, %s76
      %s79 = sphi 0, %s78
      %s93 = sphi 0, %s79
      %s97 = sphi 0, %s97
      %s99 = sphi 0, %s97
      %s100 = sphi 0, %s99
      %s114 = sphi 0, %s100
      %s118 = sphi 0, %s118
      %s120 = sphi 0, %s118
      %s121 = sphi 0, %s120
      %s135 = sphi 0, %s121
      %s139 = sphi 0, %s139
      %s141 = sphi 0, %s139
      %s142 = sphi 0, %s141
      %s156 = sphi 0, %s142
      %s164 = sphi 0, %s166
      %s167 = sphi 0, %s164
      %s168 = sphi 0, %s167
      %s184 = sphi 0, %s168
      %s192 = sphi 0, %s194
      %s195 = sphi 0, %s192
      %s196 = sphi 0, %s195
      %s212 = sphi 0, %s196
      %s220 = sphi 0, %s222
      %s223 = sphi 0, %s220
      %s224 = sphi 0, %s223
      %s240 = sphi 0, %s224
      %s248 = sphi 0, %s250
      %s251 = sphi 0, %s248
      %s252 = sphi 0, %s251
      %s268 = sphi 0, %s252
    $region4: #{tpu_custom_call.1} parent=1 // loop_header_branch
      %31 = sbr.rel (%p29) target = $region8
    $region5: #{tpu_custom_call.1} parent=1 // loop_body
      %s33 = ssub.s32 %s28, 1
      %s34 = ssub.s32 %s28, 2
      %s41 = sadd.s32 1, %s36
      %p42 = scmp.ge.s32.totalorder %s41, 1
      %s43 = scalar_select %p42, 0, %s41
      %s44 = sadd.s32 1, %s35
      %s45 = scalar_select %p42, %s44, %s35
      %p46 = scmp.ge.s32.totalorder %s45, 2
      %s47 = scalar_select %p46, 0, %s45
      %s48 = ssub.s32 %s35, %s47
      %s49 = ssub.s32 %s36, %s43
      %s50 = sor.u32 %s48, %s49
      %p51 = scmp.eq.s32.totalorder %s50, 0
      %s53 = sadd.s32 %s52, 1
      %s54 = scalar_select %p51, %s52, %s53
      %p57 = pneg %p51
      %p58 = scmp.eq.s32.totalorder %s28, 1
      %p59 = por %p57, %p58
      %p60 = scmp.ne.s32.totalorder %s52, %s55
      %p61 = scmp.eq.s32.totalorder %s28, 0
      %p62 = por %p60, %p61
      %p63 = scmp.ne.s32.totalorder %s52, %s55
      %p64 = scmp.eq.s32.totalorder %s33, 1
      %p65 = por %p63, %p64
      %p66 = scmp.ne.s32.totalorder %s55, %s56
      %p67 = scmp.eq.s32.totalorder %s33, 0
      %p68 = por %p66, %p67
      %p69 = scmp.ne.s32.totalorder %s55, %s56
      %p70 = scmp.eq.s32.totalorder %s34, 1
      %p71 = por %p69, %p70
      %p73 = scmp.ne.s32.totalorder %s56, %s72
      %p74 = scmp.eq.s32.totalorder %s34, 0
      %p75 = por %p73, %p74
      %s77 = sadd.s32 %s76, 1
      %p80 = scmp.eq.s32.totalorder %s28, 1
      %p81 = scmp.ne.s32.totalorder %s76, %s78
      %p82 = scmp.eq.s32.totalorder %s28, 0
      %p83 = por %p81, %p82
      %p84 = scmp.ne.s32.totalorder %s76, %s78
      %p85 = scmp.eq.s32.totalorder %s33, 1
      %p86 = por %p84, %p85
      %p87 = scmp.ne.s32.totalorder %s78, %s79
      %p88 = scmp.eq.s32.totalorder %s33, 0
      %p89 = por %p87, %p88
      %p90 = scmp.ne.s32.totalorder %s78, %s79
      %p91 = scmp.eq.s32.totalorder %s34, 1
      %p92 = por %p90, %p91
      %p94 = scmp.ne.s32.totalorder %s79, %s93
      %p95 = scmp.eq.s32.totalorder %s34, 0
      %p96 = por %p94, %p95
      %s98 = sadd.s32 %s97, 1
      %p101 = scmp.eq.s32.totalorder %s28, 1
      %p102 = scmp.ne.s32.totalorder %s97, %s99
      %p103 = scmp.eq.s32.totalorder %s28, 0
      %p104 = por %p102, %p103
      %p105 = scmp.ne.s32.totalorder %s97, %s99
      %p106 = scmp.eq.s32.totalorder %s33, 1
      %p107 = por %p105, %p106
      %p108 = scmp.ne.s32.totalorder %s99, %s100
      %p109 = scmp.eq.s32.totalorder %s33, 0
      %p110 = por %p108, %p109
      %p111 = scmp.ne.s32.totalorder %s99, %s100
      %p112 = scmp.eq.s32.totalorder %s34, 1
      %p113 = por %p111, %p112
      %p115 = scmp.ne.s32.totalorder %s100, %s114
      %p116 = scmp.eq.s32.totalorder %s34, 0
      %p117 = por %p115, %p116
      %s119 = sadd.s32 %s118, 1
      %p122 = scmp.eq.s32.totalorder %s28, 1
      %p123 = scmp.ne.s32.totalorder %s118, %s120
      %p124 = scmp.eq.s32.totalorder %s28, 0
      %p125 = por %p123, %p124
      %p126 = scmp.ne.s32.totalorder %s118, %s120
      %p127 = scmp.eq.s32.totalorder %s33, 1
      %p128 = por %p126, %p127
      %p129 = scmp.ne.s32.totalorder %s120, %s121
      %p130 = scmp.eq.s32.totalorder %s33, 0
      %p131 = por %p129, %p130
      %p132 = scmp.ne.s32.totalorder %s120, %s121
      %p133 = scmp.eq.s32.totalorder %s34, 1
      %p134 = por %p132, %p133
      %p136 = scmp.ne.s32.totalorder %s121, %s135
      %p137 = scmp.eq.s32.totalorder %s34, 0
      %p138 = por %p136, %p137
      %s140 = sadd.s32 %s139, 1
      %p143 = scmp.eq.s32.totalorder %s28, 1
      %p144 = scmp.ne.s32.totalorder %s139, %s141
      %p145 = scmp.eq.s32.totalorder %s28, 0
      %p146 = por %p144, %p145
      %p147 = scmp.ne.s32.totalorder %s139, %s141
      %p148 = scmp.eq.s32.totalorder %s33, 1
      %p149 = por %p147, %p148
      %p150 = scmp.ne.s32.totalorder %s141, %s142
      %p151 = scmp.eq.s32.totalorder %s33, 0
      %p152 = por %p150, %p151
      %p153 = scmp.ne.s32.totalorder %s141, %s142
      %p154 = scmp.eq.s32.totalorder %s34, 1
      %p155 = por %p153, %p154
      %p157 = scmp.ne.s32.totalorder %s142, %s156
      %p158 = scmp.eq.s32.totalorder %s34, 0
      %p159 = por %p157, %p158
      %s160 = ssub.s32 %s35, %s47
      %s161 = ssub.s32 %s36, %s43
      %s162 = sor.u32 %s160, %s161
      %p163 = scmp.eq.s32.totalorder %s162, 0
      %s165 = sadd.s32 %s164, 1
      %s166 = scalar_select %p163, %s164, %s165
      %p169 = pneg %p163
      %p170 = scmp.eq.s32.totalorder %s28, 1
      %p171 = por %p169, %p170
      %p172 = scmp.ne.s32.totalorder %s164, %s167
      %p173 = scmp.eq.s32.totalorder %s28, 0
      %p174 = por %p172, %p173
      %p175 = scmp.ne.s32.totalorder %s164, %s167
      %p176 = scmp.eq.s32.totalorder %s33, 1
      %p177 = por %p175, %p176
      %p178 = scmp.ne.s32.totalorder %s167, %s168
      %p179 = scmp.eq.s32.totalorder %s33, 0
      %p180 = por %p178, %p179
      %p181 = scmp.ne.s32.totalorder %s167, %s168
      %p182 = scmp.eq.s32.totalorder %s34, 1
      %p183 = por %p181, %p182
      %p185 = scmp.ne.s32.totalorder %s168, %s184
      %p186 = scmp.eq.s32.totalorder %s34, 0
      %p187 = por %p185, %p186
      %s188 = ssub.s32 %s35, %s47
      %s189 = ssub.s32 %s36, %s43
      %s190 = sor.u32 %s188, %s189
      %p191 = scmp.eq.s32.totalorder %s190, 0
      %s193 = sadd.s32 %s192, 1
      %s194 = scalar_select %p191, %s192, %s193
      %p197 = pneg %p191
      %p198 = scmp.eq.s32.totalorder %s28, 1
      %p199 = por %p197, %p198
      %p200 = scmp.ne.s32.totalorder %s192, %s195
      %p201 = scmp.eq.s32.totalorder %s28, 0
      %p202 = por %p200, %p201
      %p203 = scmp.ne.s32.totalorder %s192, %s195
      %p204 = scmp.eq.s32.totalorder %s33, 1
      %p205 = por %p203, %p204
      %p206 = scmp.ne.s32.totalorder %s195, %s196
      %p207 = scmp.eq.s32.totalorder %s33, 0
      %p208 = por %p206, %p207
      %p209 = scmp.ne.s32.totalorder %s195, %s196
      %p210 = scmp.eq.s32.totalorder %s34, 1
      %p211 = por %p209, %p210
      %p213 = scmp.ne.s32.totalorder %s196, %s212
      %p214 = scmp.eq.s32.totalorder %s34, 0
      %p215 = por %p213, %p214
      %s216 = ssub.s32 %s35, %s47
      %s217 = ssub.s32 %s36, %s43
      %s218 = sor.u32 %s216, %s217
      %p219 = scmp.eq.s32.totalorder %s218, 0
      %s221 = sadd.s32 %s220, 1
      %s222 = scalar_select %p219, %s220, %s221
      %p225 = pneg %p219
      %p226 = scmp.eq.s32.totalorder %s28, 1
      %p227 = por %p225, %p226
      %p228 = scmp.ne.s32.totalorder %s220, %s223
      %p229 = scmp.eq.s32.totalorder %s28, 0
      %p230 = por %p228, %p229
      %p231 = scmp.ne.s32.totalorder %s220, %s223
      %p232 = scmp.eq.s32.totalorder %s33, 1
      %p233 = por %p231, %p232
      %p234 = scmp.ne.s32.totalorder %s223, %s224
      %p235 = scmp.eq.s32.totalorder %s33, 0
      %p236 = por %p234, %p235
      %p237 = scmp.ne.s32.totalorder %s223, %s224
      %p238 = scmp.eq.s32.totalorder %s34, 1
      %p239 = por %p237, %p238
      %p241 = scmp.ne.s32.totalorder %s224, %s240
      %p242 = scmp.eq.s32.totalorder %s34, 0
      %p243 = por %p241, %p242
      %s244 = ssub.s32 %s35, %s47
      %s245 = ssub.s32 %s36, %s43
      %s246 = sor.u32 %s244, %s245
      %p247 = scmp.eq.s32.totalorder %s246, 0
      %s249 = sadd.s32 %s248, 1
      %s250 = scalar_select %p247, %s248, %s249
      %p253 = pneg %p247
      %p254 = scmp.eq.s32.totalorder %s28, 1
      %p255 = por %p253, %p254
      %p256 = scmp.ne.s32.totalorder %s248, %s251
      %p257 = scmp.eq.s32.totalorder %s28, 0
      %p258 = por %p256, %p257
      %p259 = scmp.ne.s32.totalorder %s248, %s251
      %p260 = scmp.eq.s32.totalorder %s33, 1
      %p261 = por %p259, %p260
      %p262 = scmp.ne.s32.totalorder %s251, %s252
      %p263 = scmp.eq.s32.totalorder %s33, 0
      %p264 = por %p262, %p263
      %p265 = scmp.ne.s32.totalorder %s251, %s252
      %p266 = scmp.eq.s32.totalorder %s34, 1
      %p267 = por %p265, %p266
      %p269 = scmp.ne.s32.totalorder %s252, %s268
      %p270 = scmp.eq.s32.totalorder %s34, 0
      %p271 = por %p269, %p270
      %p272 = scmp.le.s32.totalorder 1, %s28
      %p273 = scmp.lt.s32.totalorder %s28, 3
      %p274 = pnand %p272, %p273
      %p275 = pneg %p274
      // Predicated region
      $region9: #{tpu_custom_call.1} parent=5 // pred_check
        _
      $region10: #{tpu_custom_call.1} parent=5 // pred_check_branch
        %277 = sbr.rel (%p274) target = $region12
      $region11: #{tpu_custom_call.1} parent=5 // pred_region
        %s278 = ssub.s32 %s28, 1
        // Predicated region
        $region13: #{tpu_custom_call.1} parent=11 // pred_check
          %p279 = pneg %p89
        $region14: #{tpu_custom_call.1} parent=11 // pred_check_branch
          %281 = sbr.rel (%p279) target = $region16
        $region15: #{tpu_custom_call.1} parent=11 // pred_region
          _
        $region16: #{tpu_custom_call.1} parent=11 // pred_fallthru
          _
        // Predicated region
        $region17: #{tpu_custom_call.1} parent=11 // pred_check
          %p282 = pneg %p110
        $region18: #{tpu_custom_call.1} parent=11 // pred_check_branch
          %284 = sbr.rel (%p282) target = $region20
        $region19: #{tpu_custom_call.1} parent=11 // pred_region
          _
        $region20: #{tpu_custom_call.1} parent=11 // pred_fallthru
          _
        // Predicated region
        $region21: #{tpu_custom_call.1} parent=11 // pred_check
          %p285 = pneg %p131
        $region22: #{tpu_custom_call.1} parent=11 // pred_check_branch
          %287 = sbr.rel (%p285) target = $region24
        $region23: #{tpu_custom_call.1} parent=11 // pred_region
          %s289 = ssub.s32 256, 256
          %290 = vsyncadd [#allocation6], %s289
          %s291 = sshll.u32 [#allocation5], 4
          %s292 = int_to_ptr.vmem [resolvable:$true] %s291
          %297 = dma.hbm_to_vmem [thread:$0]  %s3, 256, %s292, [#allocation6], 64, 64, 4
        $region24: #{tpu_custom_call.1} parent=11 // pred_fallthru
          _
        // Predicated region
        $region25: #{tpu_custom_call.1} parent=11 // pred_check
          %p298 = pneg %p152
        $region26: #{tpu_custom_call.1} parent=11 // pred_check_branch
          %300 = sbr.rel (%p298) target = $region28
        $region27: #{tpu_custom_call.1} parent=11 // pred_region
          _
        $region28: #{tpu_custom_call.1} parent=11 // pred_fallthru
          _
      $region12: #{tpu_custom_call.1} parent=5 // pred_fallthru
        _
      %p301 = scmp.lt.s32.totalorder %s28, 2
      // Predicated region
      $region29: #{tpu_custom_call.1} parent=5 // pred_check
        %p302 = pneg %p301
      $region30: #{tpu_custom_call.1} parent=5 // pred_check_branch
        %304 = sbr.rel (%p302) target = $region32
      $region31: #{tpu_custom_call.1} parent=5 // pred_region
        // Predicated region
        $region33: #{tpu_custom_call.1} parent=31 // pred_check
          %p305 = pneg %p62
        $region34: #{tpu_custom_call.1} parent=31 // pred_check_branch
          %307 = sbr.rel (%p305) target = $region36
        $region35: #{tpu_custom_call.1} parent=31 // pred_region
          %s308 = sand.u32 %s52, 1
          %s309 = scalar_lea.sflag [#allocation3], %s308
          %s310 = sand.u32 %s52, 1
          %s311 = smul.addr %s310, 8
          %s312 = scalar_lea.vmem [#allocation2], %s311
          %s314 = ssub.s32 128, 128
          %315 = vsyncadd %s309, %s314
          %s316 = sadd.s32 %s36, %s35
          %s317 = smul.addr %s316, 128
          %s318 = scalar_lea.hbm %s0, %s317
          %s320 = sshll.u32 %s312, 4
          %s321 = int_to_ptr.vmem [resolvable:$true] %s320
          %323 = dma.hbm_to_vmem [thread:$0]  %s318, 128, %s321, %s309
        $region36: #{tpu_custom_call.1} parent=31 // pred_fallthru
          _
      $region32: #{tpu_custom_call.1} parent=5 // pred_fallthru
        _
      %p324 = scmp.le.s32.totalorder 1, %s28
      %p325 = scmp.lt.s32.totalorder %s28, 3
      %p326 = pnand %p324, %p325
      %p327 = pneg %p326
      // Predicated region
      $region37: #{tpu_custom_call.1} parent=5 // pred_check
        _
      $region38: #{tpu_custom_call.1} parent=5 // pred_check_branch
        %329 = sbr.rel (%p326) target = $region40
      $region39: #{tpu_custom_call.1} parent=5 // pred_region
        %s330 = ssub.s32 %s28, 1
        %s331 = sand.u32 %s55, 1
        %s332 = scalar_lea.sflag [#allocation3], %s331
        %s333 = sand.u32 %s55, 1
        %s334 = smul.addr %s333, 8
        %s335 = scalar_lea.vmem [#allocation2], %s334
        // Predicated region
        $region41: #{tpu_custom_call.1} parent=39 // pred_check
          %p336 = pneg %p68
        $region42: #{tpu_custom_call.1} parent=39 // pred_check_branch
          %338 = sbr.rel (%p336) target = $region44
        $region43: #{tpu_custom_call.1} parent=39 // pred_region
          %339 = dma.done %s332, 128
        $region44: #{tpu_custom_call.1} parent=39 // pred_fallthru
          _
        // Predicated region
        $region45: #{tpu_custom_call.1} parent=39 // pred_check
          %p340 = pneg %p131
        $region46: #{tpu_custom_call.1} parent=39 // pred_check_branch
          %342 = sbr.rel (%p340) target = $region48
        $region47: #{tpu_custom_call.1} parent=39 // pred_region
          %343 = dma.done [#allocation6], 256
        $region48: #{tpu_custom_call.1} parent=39 // pred_fallthru
          _
        %s344 = sand.u32 %s55, 1
        %s345 = scalar_lea.sflag [#allocation3], %s344
        %s346 = sand.u32 %s55, 1
        %s347 = smul.addr %s346, 8
        %s348 = scalar_lea.vmem [#allocation2], %s347
        %p349 = pneg %p68
        %p350 = pneg %p65
        %p351 = pneg %p89
        %p352 = pneg %p86
        %p353 = pneg %p110
        %p354 = pneg %p107
        %p355 = pneg %p131
        %p356 = pneg %p128
        %p357 = pneg %p152
        %p358 = pneg %p149
        %p359 = pneg %p180
        %p360 = pneg %p177
        %s361 = sand.u32 %s167, 1
        %s362 = scalar_lea.sflag [#allocation4], %s361
        %s363 = sand.u32 %s167, 1
        %s364 = smul.addr %s363, 4
        %s365 = scalar_lea.vmem [#allocation7], %s364
        %p366 = pneg %p208
        %p367 = pneg %p205
        %s368 = sand.u32 %s33, 1
        %s369 = scalar_lea.sflag [#allocation9], %s368
        %s370 = sand.u32 %s195, 1
        %s371 = smul.addr %s370, 4
        %s372 = scalar_lea.vmem [#allocation8], %s371
        %p373 = pneg %p236
        %p374 = pneg %p233
        %s375 = sand.u32 %s33, 1
        %s376 = scalar_lea.sflag [#allocation9], %s375
        %s377 = sand.u32 %s223, 1
        %s378 = smul.addr %s377, 4
        %s379 = scalar_lea.vmem [#allocation10], %s378
        %p380 = pneg %p264
        %p381 = pneg %p261
        %s382 = sand.u32 %s251, 1
        %s383 = scalar_lea.sflag [#allocation12], %s382
        %s384 = sand.u32 %s251, 1
        %s385 = smul.addr %s384, 8
        %s386 = scalar_lea.vmem [#allocation11], %s385
        %v388 = vld [vmem:[%s335] sm:$0xff]
        %v389 = vld [vmem:[%s1] sm:$0x1]
        %v390 = vld [vmem:[%s2] sm:$0x1]
        %vm391 = vcmask 261120
        %v392 = vsel %vm391, %v388, 0.0
        %393 = vadd.xlane.f32.xlu0 %v392
        %v394 = vpop.xlane.xlu0 %393
        %v395 = vrcp.pop 32.0
        %v396 = vmul.f32 %v394, %v395
        %v397 = vsub.f32 %v388, %v396
        %v398 = vmul.f32 %v397, %v397
        %v399 = vsel %vm391, %v398, 0.0
        %400 = vadd.xlane.f32.xlu0 %v399
        %v401 = vpop.xlane.xlu0 %400
        %v402 = vmul.f32 %v401, %v395
        %v403 = vadd.f32 %v402, 1e-05
        %v404 = vrsqrt.pop %v403
        %v405 = vmul.f32 %v397, %v404
        %v407 = vlaneseq
        %v408 = vshrl.u32 %v407, 7
        %v409 = vsub.s32 0, %v408
        %v410 = vrot.slane %v389, %v409
        %v412 = vmul.f32 %v405, %v410
        %v414 = vlaneseq
        %v415 = vshrl.u32 %v414, 7
        %v416 = vsub.s32 0, %v415
        %v417 = vrot.slane %v390, %v416
        %v419 = vadd.f32 %v412, %v417
        %v420 = vpack.c.bf16 %v419, %v419
        %v421 = vld [vmem:[#allocation5] sm:$0xf]
        %v422 = vld [vmem:[#allocation5 + $0x4] sm:$0xf]
        %v423 = vld [vmem:[#allocation5 + $0x8] sm:$0xf]
        %v424 = vld [vmem:[#allocation5 + $0xc] sm:$0xf]
        %v425 = vld [vmem:[%s4] sm:$0x1]
        %v427 = vlaneseq
        %v428 = vshrl.u32 %v427, 7
        %v429 = vsub.s32 0, %v428
        %v430 = vrot.slane %v425, %v429
        %v436 = vunpack.c.l.b16 %v421
        %v437 = vunpack.c.l.b16 %v422
        %v438 = vunpack.c.l.b16 %v423
        %v439 = vunpack.c.l.b16 %v424
        %v440 = vpack.c.b16 %v437, %v436
        %v441 = vpack.c.b16 %v439, %v438
        %v445 = vsel %vm391, %v420, 0
        %447 = vmatprep.subr.bf16.mxu0 0
        %448 = vmatpush1.bf16.msra.mxu0 %v440
        %449 = vmatprep.subr.bf16.mxu0 0
        %450 = vmatpush1.bf16.msra.mxu0 %v441
        %451 = vmatprep.subr.bf16.mxu0 0
        %452 = vmatpush1.bf16.msra.mxu0 0
        %453 = vmatprep.subr.bf16.mxu0 0
        %454 = vmatpush1.bf16.msra.mxu0 0
        %455 = vmatprep.subr.bf16.mxu0 0
        %456 = vmatpush1.bf16.msra.mxu0 0
        %457 = vmatprep.subr.bf16.mxu0 0
        %458 = vmatpush1.bf16.msra.mxu0 0
        %459 = vmatprep.subr.bf16.mxu0 0
        %460 = vmatpush1.bf16.msra.mxu0 0
        %461 = vmatprep.subr.bf16.mxu0 0
        %462 = vmatpush1.bf16.msra.mxu0 0
        %463 = vmatprep.subr.bf16.mxu0 0
        %464 = vmatpush1.bf16.msra.mxu0 0
        %465 = vmatprep.subr.bf16.mxu0 0
        %466 = vmatpush1.bf16.msra.mxu0 0
        %467 = vmatprep.subr.bf16.mxu0 0
        %468 = vmatpush1.bf16.msra.mxu0 0
        %469 = vmatprep.subr.bf16.mxu0 0
        %470 = vmatpush1.bf16.msra.mxu0 0
        %471 = vmatprep.subr.bf16.mxu0 0
        %472 = vmatpush1.bf16.msra.mxu0 0
        %473 = vmatprep.subr.bf16.mxu0 0
        %474 = vmatpush1.bf16.msra.mxu0 0
        %475 = vmatprep.subr.bf16.mxu0 0
        %476 = vmatpush1.bf16.msra.mxu0 0
        %477 = vmatprep.subr.bf16.mxu0 0
        %478 = vmatpush1.bf16.msra.mxu0 0
        %479 = vmatprep.mubr.bf16.mxu0 0
        %480 = vmatmul.mubr.bf16.gmra.mrb[0].mxu0 %v445
        %v481 = vpop.f32.mrb[0].mxu0
        %v482 = vadd.f32 %v430, %v481
        %v483 = vpop.f32.mrb[0].mxu0
        %v484 = vpop.f32.mrb[0].mxu0
        %v485 = vpop.f32.mrb[0].mxu0
        %486 = vdwg.mxu0
        %v487 = vpack.c.bf16 %v482, %v482
        %vm488 = vcmask 257024
        %489 = vst.msk [vmem:[%s365] sm:$0xf] %vm488, %v487
        %v491 = vunpack.c.l.b16 %v487
        %v492 = vpack.c.b16 %v491, %v491
        %493 = vrot.lane.b32.xlu0 %v492, 96
        %v494 = vpop.permute.xlu0 %493
        %496 = vst.msk [vmem:[%s372] sm:$0xf] %vm488, %v494
        %497 = vrot.lane.b32.xlu0 %v492, 64
        %v498 = vpop.permute.xlu0 %497
        %500 = vst.msk [vmem:[%s379] sm:$0xf] %vm488, %v498
        %502 = vrot.lane.b32.xlu0 %v482, 32
        %v503 = vpop.permute.xlu0 %502
        %505 = vst.msk [vmem:[%s386] sm:$0xff] %vm391, %v503
        %s506 = sand.u32 %s167, 1
        %s507 = scalar_lea.sflag [#allocation4], %s506
        %s508 = sand.u32 %s167, 1
        %s509 = smul.addr %s508, 4
        %s510 = scalar_lea.vmem [#allocation7], %s509
        %s511 = sand.u32 %s33, 1
        %s512 = scalar_lea.sflag [#allocation9], %s511
        %s513 = sand.u32 %s195, 1
        %s514 = smul.addr %s513, 4
        %s515 = scalar_lea.vmem [#allocation8], %s514
        %s516 = sand.u32 %s33, 1
        %s517 = scalar_lea.sflag [#allocation9], %s516
        %s518 = sand.u32 %s223, 1
        %s519 = smul.addr %s518, 4
        %s520 = scalar_lea.vmem [#allocation10], %s519
        %s521 = sand.u32 %s251, 1
        %s522 = scalar_lea.sflag [#allocation12], %s521
        %s523 = sand.u32 %s251, 1
        %s524 = smul.addr %s523, 8
        %s525 = scalar_lea.vmem [#allocation11], %s524
        // Predicated region
        $region49: #{tpu_custom_call.1} parent=39 // pred_check
          %p526 = pneg %p177
        $region50: #{tpu_custom_call.1} parent=39 // pred_check_branch
          %528 = sbr.rel (%p526) target = $region52
        $region51: #{tpu_custom_call.1} parent=39 // pred_region
          %s530 = ssub.s32 64, 64
          %531 = vsyncadd %s507, %s530
          %s532 = sadd.s32 %s38, %s37
          %s533 = smul.addr %s532, 64
          %s534 = scalar_lea.hbm %s5, %s533
          %s536 = sshll.u32 %s510, 4
          %s537 = int_to_ptr.vmem [resolvable:$true] %s536
          %539 = dma.vmem_to_hbm [thread:$0]  %s537, 64, %s534, %s507
        $region52: #{tpu_custom_call.1} parent=39 // pred_fallthru
          _
        // Predicated region
        $region53: #{tpu_custom_call.1} parent=39 // pred_check
          %p540 = pneg %p205
        $region54: #{tpu_custom_call.1} parent=39 // pred_check_branch
          %542 = sbr.rel (%p540) target = $region56
        $region55: #{tpu_custom_call.1} parent=39 // pred_region
          %s544 = ssub.s32 64, 64
          %545 = vsyncadd %s512, %s544
          %s546 = sadd.s32 %s38, %s37
          %s547 = smul.addr %s546, 64
          %s548 = scalar_lea.hbm %s6, %s547
          %s550 = sshll.u32 %s515, 4
          %s551 = int_to_ptr.vmem [resolvable:$true] %s550
          %553 = dma.vmem_to_hbm [thread:$0]  %s551, 64, %s548, %s512
        $region56: #{tpu_custom_call.1} parent=39 // pred_fallthru
          _
        // Predicated region
        $region57: #{tpu_custom_call.1} parent=39 // pred_check
          %p554 = pneg %p233
        $region58: #{tpu_custom_call.1} parent=39 // pred_check_branch
          %556 = sbr.rel (%p554) target = $region60
        $region59: #{tpu_custom_call.1} parent=39 // pred_region
          %s558 = ssub.s32 64, 64
          %559 = vsyncadd %s517, %s558
          %s560 = sadd.s32 %s38, %s37
          %s561 = smul.addr %s560, 64
          %s562 = scalar_lea.hbm %s7, %s561
          %s564 = sshll.u32 %s520, 4
          %s565 = int_to_ptr.vmem [resolvable:$true] %s564
          %567 = dma.vmem_to_hbm [thread:$0]  %s565, 64, %s562, %s517
        $region60: #{tpu_custom_call.1} parent=39 // pred_fallthru
          _
        // Predicated region
        $region61: #{tpu_custom_call.1} parent=39 // pred_check
          %p568 = pneg %p261
        $region62: #{tpu_custom_call.1} parent=39 // pred_check_branch
          %570 = sbr.rel (%p568) target = $region64
        $region63: #{tpu_custom_call.1} parent=39 // pred_region
          %s572 = ssub.s32 128, 128
          %573 = vsyncadd %s522, %s572
          %s574 = sadd.s32 %s38, %s37
          %s575 = smul.addr %s574, 128
          %s576 = scalar_lea.hbm %s8, %s575
          %s578 = sshll.u32 %s525, 4
          %s579 = int_to_ptr.vmem [resolvable:$true] %s578
          %581 = dma.vmem_to_hbm [thread:$0]  %s579, 128, %s576, %s522
        $region64: #{tpu_custom_call.1} parent=39 // pred_fallthru
          _
      $region40: #{tpu_custom_call.1} parent=5 // pred_fallthru
        _
      %p582 = scmp.le.s32.totalorder 2, %s28
      // Predicated region
      $region65: #{tpu_custom_call.1} parent=5 // pred_check
        %p583 = pneg %p582
      $region66: #{tpu_custom_call.1} parent=5 // pred_check_branch
        %585 = sbr.rel (%p583) target = $region68
      $region67: #{tpu_custom_call.1} parent=5 // pred_region
        %s586 = ssub.s32 %s28, 2
        // Predicated region
        $region69: #{tpu_custom_call.1} parent=67 // pred_check
          %p587 = pneg %p183
        $region70: #{tpu_custom_call.1} parent=67 // pred_check_branch
          %589 = sbr.rel (%p587) target = $region72
        $region71: #{tpu_custom_call.1} parent=67 // pred_region
          %s590 = sand.u32 %s168, 1
          %s591 = scalar_lea.sflag [#allocation4], %s590
          %s592 = sand.u32 %s168, 1
          %s593 = smul.addr %s592, 4
          %s594 = scalar_lea.vmem [#allocation7], %s593
          %595 = dma.done %s591, 64
        $region72: #{tpu_custom_call.1} parent=67 // pred_fallthru
          _
        // Predicated region
        $region73: #{tpu_custom_call.1} parent=67 // pred_check
          %p596 = pneg %p211
        $region74: #{tpu_custom_call.1} parent=67 // pred_check_branch
          %598 = sbr.rel (%p596) target = $region76
        $region75: #{tpu_custom_call.1} parent=67 // pred_region
          %s599 = sand.u32 %s34, 1
          %s600 = scalar_lea.sflag [#allocation9], %s599
          %s601 = sand.u32 %s196, 1
          %s602 = smul.addr %s601, 4
          %s603 = scalar_lea.vmem [#allocation8], %s602
          %604 = dma.done %s600, 64
        $region76: #{tpu_custom_call.1} parent=67 // pred_fallthru
          _
        // Predicated region
        $region77: #{tpu_custom_call.1} parent=67 // pred_check
          %p605 = pneg %p239
        $region78: #{tpu_custom_call.1} parent=67 // pred_check_branch
          %607 = sbr.rel (%p605) target = $region80
        $region79: #{tpu_custom_call.1} parent=67 // pred_region
          %s608 = sand.u32 %s34, 1
          %s609 = scalar_lea.sflag [#allocation9], %s608
          %s610 = sand.u32 %s224, 1
          %s611 = smul.addr %s610, 4
          %s612 = scalar_lea.vmem [#allocation10], %s611
          %613 = dma.done %s609, 64
        $region80: #{tpu_custom_call.1} parent=67 // pred_fallthru
          _
        // Predicated region
        $region81: #{tpu_custom_call.1} parent=67 // pred_check
          %p614 = pneg %p267
        $region82: #{tpu_custom_call.1} parent=67 // pred_check_branch
          %616 = sbr.rel (%p614) target = $region84
        $region83: #{tpu_custom_call.1} parent=67 // pred_region
          %s617 = sand.u32 %s252, 1
          %s618 = scalar_lea.sflag [#allocation12], %s617
          %s619 = sand.u32 %s252, 1
          %s620 = smul.addr %s619, 8
          %s621 = scalar_lea.vmem [#allocation11], %s620
          %622 = dma.done %s618, 128
        $region84: #{tpu_custom_call.1} parent=67 // pred_fallthru
          _
      $region68: #{tpu_custom_call.1} parent=5 // pred_fallthru
        _
    $region6: #{tpu_custom_call.1} parent=1 // loop_footer
      %s32 = sadd.s32 1, %s28
    $region7: #{tpu_custom_call.1} parent=1 // loop_footer_branch
      %27 = sbr.rel target = $region3
    $region8: #{tpu_custom_call.1} parent=1 // loop_exit
      _
    %623 = vsyncpa [#allocation3], 1
    %s624 = scalar_lea.sflag [#allocation3], 1
    %625 = vsyncpa %s624, 1
    %626 = vsyncpa [#allocation6], 1
    %627 = vsyncpa [#allocation4], 1
    %s628 = scalar_lea.sflag [#allocation4], 1
    %629 = vsyncpa %s628, 1
    %630 = vsyncpa [#allocation9], 1
    %s631 = scalar_lea.sflag [#allocation9], 1
    %632 = vsyncpa %s631, 1
    %633 = vsyncpa [#allocation12], 1
    %s634 = scalar_lea.sflag [#allocation12], 1
    %635 = vsyncpa %s634, 1

// kernel: tpu_custom_call.1
$region0: #{tpu_custom_call.1}
  #allocation0 [shape = 'u32[]', space=smem, size = 0x4, offset = 0x4, fixed_abs, tag = 'smem constant byte address 0x4 - core index']
  #allocation1 [shape = 'u32[144,128]{1,0:T(1,128)}', space=vmem, size = 0x12000, scoped, tag = 'internal scratch']
  %s0 = inlined_call_operand.hbm [shape: f32[2,8,32], index: 0, kind: input, shape index: {}]
  %s1 = inlined_call_operand.vmem [shape: f32[1,32], index: 1, kind: input, shape index: {}]
  %s2 = inlined_call_operand.vmem [shape: f32[1,32], index: 2, kind: input, shape index: {}]
  %s3 = inlined_call_operand.hbm [shape: bf16[32,128], index: 3, kind: input, shape index: {}]
  %s4 = inlined_call_operand.vmem [shape: f32[1,128], index: 4, kind: input, shape index: {}]
  %s5 = inlined_call_operand.hbm [shape: bf16[2,8,32], index: 5, kind: output, shape index: {0}]
  %s6 = inlined_call_operand.hbm [shape: bf16[2,8,32], index: 6, kind: output, shape index: {1}]
  %s7 = inlined_call_operand.hbm [shape: bf16[2,8,32], index: 7, kind: output, shape index: {2}]
  %s8 = inlined_call_operand.hbm [shape: f32[2,8,32], index: 8, kind: output, shape index: {3}]
  %9 = xla_tuple %s5, %s6, %s7, %s8
  %s10 = sld [smem:[#allocation0]]
  $region85: #{tpu_custom_call.1} parent=0
    _
  %s12 = ssub.s32 1, %s10
  %s13 = scalar_select 0, %s12, %s10
  $region1: #{tpu_custom_call.1} parent=0
    #allocation2 [shape = 'u8[8192]{0}', space=vmem, size = 0x2000, scoped, tag = 'input window, operand 0']
    #allocation3 [shape = 's32[2]{0}', space=sflag, size = 0x8, scoped, tag = 'scoped memory for tpu_custom_call.1']
    #allocation4 [shape = 's32[2]{0}', space=sflag, size = 0x8, scoped, tag = 'scoped memory for tpu_custom_call.1']
    #allocation5 [shape = 'u8[8192]{0}', space=vmem, size = 0x2000, scoped, tag = 'input window, operand 3, single buffered']
    #allocation6 [shape = 's32[1]{0}', space=sflag, size = 0x4, scoped, tag = 'scoped memory for tpu_custom_call.1']
    #allocation7 [shape = 'u8[4096]{0}', space=vmem, size = 0x1000, scoped, tag = 'output window, operand 0']
    #allocation8 [shape = 'u8[4096]{0}', space=vmem, size = 0x1000, scoped, tag = 'output window, operand 1']
    #allocation9 [shape = 's32[2]{0}', space=sflag, size = 0x8, scoped, tag = 'scoped memory for tpu_custom_call.1']
    #allocation10 [shape = 'u8[4096]{0}', space=vmem, size = 0x1000, scoped, tag = 'output window, operand 2']
    #allocation11 [shape = 'u8[8192]{0}', space=vmem, size = 0x2000, scoped, tag = 'output window, operand 3']
    #allocation12 [shape = 's32[2]{0}', space=sflag, size = 0x8, scoped, tag = 'scoped memory for tpu_custom_call.1']
    %14 = vsyncpa [#allocation3], 0
    %s15 = scalar_lea.sflag [#allocation3], 1
    %16 = vsyncpa %s15, 0
    %17 = vsyncpa [#allocation6], 0
    %18 = vsyncpa [#allocation4], 0
    %s19 = scalar_lea.sflag [#allocation4], 1
    %20 = vsyncpa %s19, 0
    %21 = vsyncpa [#allocation9], 0
    %s22 = scalar_lea.sflag [#allocation9], 1
    %23 = vsyncpa %s22, 0
    %24 = vsyncpa [#allocation12], 0
    %s25 = scalar_lea.sflag [#allocation12], 1
    %26 = vsyncpa %s25, 0
    loop: start=0, step=1, limit=4
    $region2: #{tpu_custom_call.1} parent=1 // loop_pre_header
      _
    $region3: #{tpu_custom_call.1} parent=1 // loop_header
      %s28 = sphi 0, %s32
      %p29 = scmp.ge.s32.totalorder %s28, 4
      %s35 = sphi 0, %s47
      %s36 = sphi 0, %s43
      %s37 = sphi 0, %s35
      %s38 = sphi 0, %s36
      %s39 = sphi 0, %s37
      %s40 = sphi 0, %s38
      %s52 = sphi 0, %s54
      %s55 = sphi 0, %s52
      %s56 = sphi 0, %s55
      %s72 = sphi 0, %s56
      %s76 = sphi 0, %s76
      %s78 = sphi 0, %s76
      %s79 = sphi 0, %s78
      %s93 = sphi 0, %s79
      %s97 = sphi 0, %s97
      %s99 = sphi 0, %s97
      %s100 = sphi 0, %s99
      %s114 = sphi 0, %s100
      %s118 = sphi 0, %s118
      %s120 = sphi 0, %s118
      %s121 = sphi 0, %s120
      %s135 = sphi 0, %s121
      %s139 = sphi 0, %s139
      %s141 = sphi 0, %s139
      %s142 = sphi 0, %s141
      %s156 = sphi 0, %s142
      %s164 = sphi 0, %s166
      %s167 = sphi 0, %s164
      %s168 = sphi 0, %s167
      %s184 = sphi 0, %s168
      %s192 = sphi 0, %s194
      %s195 = sphi 0, %s192
      %s196 = sphi 0, %s195
      %s212 = sphi 0, %s196
      %s220 = sphi 0, %s222
      %s223 = sphi 0, %s220
      %s224 = sphi 0, %s223
      %s240 = sphi 0, %s224
      %s248 = sphi 0, %s250
      %s251 = sphi 0, %s248
      %s252 = sphi 0, %s251
      %s268 = sphi 0, %s252
    $region4: #{tpu_custom_call.1} parent=1 // loop_header_branch
      %31 = sbr.rel (%p29) target = $region8
    $region5: #{tpu_custom_call.1} parent=1 // loop_body
      %s33 = ssub.s32 %s28, 1
      %s34 = ssub.s32 %s28, 2
      %s41 = sadd.s32 1, %s36
      %p42 = scmp.ge.s32.totalorder %s41, 1
      %s43 = scalar_select %p42, 0, %s41
      %s44 = sadd.s32 1, %s35
      %s45 = scalar_select %p42, %s44, %s35
      %p46 = scmp.ge.s32.totalorder %s45, 2
      %s47 = scalar_select %p46, 0, %s45
      %s48 = ssub.s32 %s35, %s47
      %s49 = ssub.s32 %s36, %s43
      %s50 = sor.u32 %s48, %s49
      %p51 = scmp.eq.s32.totalorder %s50, 0
      %s53 = sadd.s32 %s52, 1
      %s54 = scalar_select %p51, %s52, %s53
      %p57 = pneg %p51
      %p58 = scmp.eq.s32.totalorder %s28, 1
      %p59 = por %p57, %p58
      %p60 = scmp.ne.s32.totalorder %s52, %s55
      %p61 = scmp.eq.s32.totalorder %s28, 0
      %p62 = por %p60, %p61
      %p63 = scmp.ne.s32.totalorder %s52, %s55
      %p64 = scmp.eq.s32.totalorder %s33, 1
      %p65 = por %p63, %p64
      %p66 = scmp.ne.s32.totalorder %s55, %s56
      %p67 = scmp.eq.s32.totalorder %s33, 0
      %p68 = por %p66, %p67
      %p69 = scmp.ne.s32.totalorder %s55, %s56
      %p70 = scmp.eq.s32.totalorder %s34, 1
      %p71 = por %p69, %p70
      %p73 = scmp.ne.s32.totalorder %s56, %s72
      %p74 = scmp.eq.s32.totalorder %s34, 0
      %p75 = por %p73, %p74
      %s77 = sadd.s32 %s76, 1
      %p80 = scmp.eq.s32.totalorder %s28, 1
      %p81 = scmp.ne.s32.totalorder %s76, %s78
      %p82 = scmp.eq.s32.totalorder %s28, 0
      %p83 = por %p81, %p82
      %p84 = scmp.ne.s32.totalorder %s76, %s78
      %p85 = scmp.eq.s32.totalorder %s33, 1
      %p86 = por %p84, %p85
      %p87 = scmp.ne.s32.totalorder %s78, %s79
      %p88 = scmp.eq.s32.totalorder %s33, 0
      %p89 = por %p87, %p88
      %p90 = scmp.ne.s32.totalorder %s78, %s79
      %p91 = scmp.eq.s32.totalorder %s34, 1
      %p92 = por %p90, %p91
      %p94 = scmp.ne.s32.totalorder %s79, %s93
      %p95 = scmp.eq.s32.totalorder %s34, 0
      %p96 = por %p94, %p95
      %s98 = sadd.s32 %s97, 1
      %p101 = scmp.eq.s32.totalorder %s28, 1
      %p102 = scmp.ne.s32.totalorder %s97, %s99
      %p103 = scmp.eq.s32.totalorder %s28, 0
      %p104 = por %p102, %p103
      %p105 = scmp.ne.s32.totalorder %s97, %s99
      %p106 = scmp.eq.s32.totalorder %s33, 1
      %p107 = por %p105, %p106
      %p108 = scmp.ne.s32.totalorder %s99, %s100
      %p109 = scmp.eq.s32.totalorder %s33, 0
      %p110 = por %p108, %p109
      %p111 = scmp.ne.s32.totalorder %s99, %s100
      %p112 = scmp.eq.s32.totalorder %s34, 1
      %p113 = por %p111, %p112
      %p115 = scmp.ne.s32.totalorder %s100, %s114
      %p116 = scmp.eq.s32.totalorder %s34, 0
      %p117 = por %p115, %p116
      %s119 = sadd.s32 %s118, 1
      %p122 = scmp.eq.s32.totalorder %s28, 1
      %p123 = scmp.ne.s32.totalorder %s118, %s120
      %p124 = scmp.eq.s32.totalorder %s28, 0
      %p125 = por %p123, %p124
      %p126 = scmp.ne.s32.totalorder %s118, %s120
      %p127 = scmp.eq.s32.totalorder %s33, 1
      %p128 = por %p126, %p127
      %p129 = scmp.ne.s32.totalorder %s120, %s121
      %p130 = scmp.eq.s32.totalorder %s33, 0
      %p131 = por %p129, %p130
      %p132 = scmp.ne.s32.totalorder %s120, %s121
      %p133 = scmp.eq.s32.totalorder %s34, 1
      %p134 = por %p132, %p133
      %p136 = scmp.ne.s32.totalorder %s121, %s135
      %p137 = scmp.eq.s32.totalorder %s34, 0
      %p138 = por %p136, %p137
      %s140 = sadd.s32 %s139, 1
      %p143 = scmp.eq.s32.totalorder %s28, 1
      %p144 = scmp.ne.s32.totalorder %s139, %s141
      %p145 = scmp.eq.s32.totalorder %s28, 0
      %p146 = por %p144, %p145
      %p147 = scmp.ne.s32.totalorder %s139, %s141
      %p148 = scmp.eq.s32.totalorder %s33, 1
      %p149 = por %p147, %p148
      %p150 = scmp.ne.s32.totalorder %s141, %s142
      %p151 = scmp.eq.s32.totalorder %s33, 0
      %p152 = por %p150, %p151
      %p153 = scmp.ne.s32.totalorder %s141, %s142
      %p154 = scmp.eq.s32.totalorder %s34, 1
      %p155 = por %p153, %p154
      %p157 = scmp.ne.s32.totalorder %s142, %s156
      %p158 = scmp.eq.s32.totalorder %s34, 0
      %p159 = por %p157, %p158
      %s160 = ssub.s32 %s35, %s47
      %s161 = ssub.s32 %s36, %s43
      %s162 = sor.u32 %s160, %s161
      %p163 = scmp.eq.s32.totalorder %s162, 0
      %s165 = sadd.s32 %s164, 1
      %s166 = scalar_select %p163, %s164, %s165
      %p169 = pneg %p163
      %p170 = scmp.eq.s32.totalorder %s28, 1
      %p171 = por %p169, %p170
      %p172 = scmp.ne.s32.totalorder %s164, %s167
      %p173 = scmp.eq.s32.totalorder %s28, 0
      %p174 = por %p172, %p173
      %p175 = scmp.ne.s32.totalorder %s164, %s167
      %p176 = scmp.eq.s32.totalorder %s33, 1
      %p177 = por %p175, %p176
      %p178 = scmp.ne.s32.totalorder %s167, %s168
      %p179 = scmp.eq.s32.totalorder %s33, 0
      %p180 = por %p178, %p179
      %p181 = scmp.ne.s32.totalorder %s167, %s168
      %p182 = scmp.eq.s32.totalorder %s34, 1
      %p183 = por %p181, %p182
      %p185 = scmp.ne.s32.totalorder %s168, %s184
      %p186 = scmp.eq.s32.totalorder %s34, 0
      %p187 = por %p185, %p186
      %s188 = ssub.s32 %s35, %s47
      %s189 = ssub.s32 %s36, %s43
      %s190 = sor.u32 %s188, %s189
      %p191 = scmp.eq.s32.totalorder %s190, 0
      %s193 = sadd.s32 %s192, 1
      %s194 = scalar_select %p191, %s192, %s193
      %p197 = pneg %p191
      %p198 = scmp.eq.s32.totalorder %s28, 1
      %p199 = por %p197, %p198
      %p200 = scmp.ne.s32.totalorder %s192, %s195
      %p201 = scmp.eq.s32.totalorder %s28, 0
      %p202 = por %p200, %p201
      %p203 = scmp.ne.s32.totalorder %s192, %s195
      %p204 = scmp.eq.s32.totalorder %s33, 1
      %p205 = por %p203, %p204
      %p206 = scmp.ne.s32.totalorder %s195, %s196
      %p207 = scmp.eq.s32.totalorder %s33, 0
      %p208 = por %p206, %p207
      %p209 = scmp.ne.s32.totalorder %s195, %s196
      %p210 = scmp.eq.s32.totalorder %s34, 1
      %p211 = por %p209, %p210
      %p213 = scmp.ne.s32.totalorder %s196, %s212
      %p214 = scmp.eq.s32.totalorder %s34, 0
      %p215 = por %p213, %p214
      %s216 = ssub.s32 %s35, %s47
      %s217 = ssub.s32 %s36, %s43
      %s218 = sor.u32 %s216, %s217
      %p219 = scmp.eq.s32.totalorder %s218, 0
      %s221 = sadd.s32 %s220, 1
      %s222 = scalar_select %p219, %s220, %s221
      %p225 = pneg %p219
      %p226 = scmp.eq.s32.totalorder %s28, 1
      %p227 = por %p225, %p226
      %p228 = scmp.ne.s32.totalorder %s220, %s223
      %p229 = scmp.eq.s32.totalorder %s28, 0
      %p230 = por %p228, %p229
      %p231 = scmp.ne.s32.totalorder %s220, %s223
      %p232 = scmp.eq.s32.totalorder %s33, 1
      %p233 = por %p231, %p232
      %p234 = scmp.ne.s32.totalorder %s223, %s224
      %p235 = scmp.eq.s32.totalorder %s33, 0
      %p236 = por %p234, %p235
      %p237 = scmp.ne.s32.totalorder %s223, %s224
      %p238 = scmp.eq.s32.totalorder %s34, 1
      %p239 = por %p237, %p238
      %p241 = scmp.ne.s32.totalorder %s224, %s240
      %p242 = scmp.eq.s32.totalorder %s34, 0
      %p243 = por %p241, %p242
      %s244 = ssub.s32 %s35, %s47
      %s245 = ssub.s32 %s36, %s43
      %s246 = sor.u32 %s244, %s245
      %p247 = scmp.eq.s32.totalorder %s246, 0
      %s249 = sadd.s32 %s248, 1
      %s250 = scalar_select %p247, %s248, %s249
      %p253 = pneg %p247
      %p254 = scmp.eq.s32.totalorder %s28, 1
      %p255 = por %p253, %p254
      %p256 = scmp.ne.s32.totalorder %s248, %s251
      %p257 = scmp.eq.s32.totalorder %s28, 0
      %p258 = por %p256, %p257
      %p259 = scmp.ne.s32.totalorder %s248, %s251
      %p260 = scmp.eq.s32.totalorder %s33, 1
      %p261 = por %p259, %p260
      %p262 = scmp.ne.s32.totalorder %s251, %s252
      %p263 = scmp.eq.s32.totalorder %s33, 0
      %p264 = por %p262, %p263
      %p265 = scmp.ne.s32.totalorder %s251, %s252
      %p266 = scmp.eq.s32.totalorder %s34, 1
      %p267 = por %p265, %p266
      %p269 = scmp.ne.s32.totalorder %s252, %s268
      %p270 = scmp.eq.s32.totalorder %s34, 0
      %p271 = por %p269, %p270
      %p272 = scmp.le.s32.totalorder 1, %s28
      %p273 = scmp.lt.s32.totalorder %s28, 3
      %p274 = pnand %p272, %p273
      %p275 = pneg %p274
      // Predicated region
      $region9: #{tpu_custom_call.1} parent=5 // pred_check
        _
      $region10: #{tpu_custom_call.1} parent=5 // pred_check_branch
        %277 = sbr.rel (%p274) target = $region12
      $region11: #{tpu_custom_call.1} parent=5 // pred_region
        %s278 = ssub.s32 %s28, 1
        // Predicated region
        $region13: #{tpu_custom_call.1} parent=11 // pred_check
          %p279 = pneg %p89
        $region14: #{tpu_custom_call.1} parent=11 // pred_check_branch
          %281 = sbr.rel (%p279) target = $region16
        $region15: #{tpu_custom_call.1} parent=11 // pred_region
          _
        $region16: #{tpu_custom_call.1} parent=11 // pred_fallthru
          _
        // Predicated region
        $region17: #{tpu_custom_call.1} parent=11 // pred_check
          %p282 = pneg %p110
        $region18: #{tpu_custom_call.1} parent=11 // pred_check_branch
          %284 = sbr.rel (%p282) target = $region20
        $region19: #{tpu_custom_call.1} parent=11 // pred_region
          _
        $region20: #{tpu_custom_call.1} parent=11 // pred_fallthru
          _
        // Predicated region
        $region21: #{tpu_custom_call.1} parent=11 // pred_check
          %p285 = pneg %p131
        $region22: #{tpu_custom_call.1} parent=11 // pred_check_branch
          %287 = sbr.rel (%p285) target = $region24
        $region23: #{tpu_custom_call.1} parent=11 // pred_region
          %s289 = ssub.s32 256, 256
          %290 = vsyncadd [#allocation6], %s289
          %s291 = sshll.u32 [#allocation5], 4
          %s292 = int_to_ptr.vmem [resolvable:$true] %s291
          %297 = dma.hbm_to_vmem [thread:$0]  %s3, 256, %s292, [#allocation6], 64, 64, 4
        $region24: #{tpu_custom_call.1} parent=11 // pred_fallthru
          _
        // Predicated region
        $region25: #{tpu_custom_call.1} parent=11 // pred_check
          %p298 = pneg %p152
        $region26: #{tpu_custom_call.1} parent=11 // pred_check_branch
          %300 = sbr.rel (%p298) target = $region28
        $region27: #{tpu_custom_call.1} parent=11 // pred_region
          _
        $region28: #{tpu_custom_call.1} parent=11 // pred_fallthru
          _
      $region12: #{tpu_custom_call.1} parent=5 // pred_fallthru
        _
      %p301 = scmp.lt.s32.totalorder %s28, 2
      // Predicated region
      $region29: #{tpu_custom_call.1} parent=5 // pred_check
        %p302 = pneg %p301
      $region30: #{tpu_custom_call.1} parent=5 // pred_check_branch
        %304 = sbr.rel (%p302) target = $region32
      $region31: #{tpu_custom_call.1} parent=5 // pred_region
        // Predicated region
        $region33: #{tpu_custom_call.1} parent=31 // pred_check
          %p305 = pneg %p62
        $region34: #{tpu_custom_call.1} parent=31 // pred_check_branch
          %307 = sbr.rel (%p305) target = $region36
        $region35: #{tpu_custom_call.1} parent=31 // pred_region
          %s308 = sand.u32 %s52, 1
          %s309 = scalar_lea.sflag [#allocation3], %s308
          %s310 = sand.u32 %s52, 1
          %s311 = smul.addr %s310, 8
          %s312 = scalar_lea.vmem [#allocation2], %s311
          %s314 = ssub.s32 128, 128
          %315 = vsyncadd %s309, %s314
          %s316 = sadd.s32 %s36, %s35
          %s317 = smul.addr %s316, 128
          %s318 = scalar_lea.hbm %s0, %s317
          %s320 = sshll.u32 %s312, 4
          %s321 = int_to_ptr.vmem [resolvable:$true] %s320
          %323 = dma.hbm_to_vmem [thread:$0]  %s318, 128, %s321, %s309
        $region36: #{tpu_custom_call.1} parent=31 // pred_fallthru
          _
      $region32: #{tpu_custom_call.1} parent=5 // pred_fallthru
        _
      %p324 = scmp.le.s32.totalorder 1, %s28
      %p325 = scmp.lt.s32.totalorder %s28, 3
      %p326 = pnand %p324, %p325
      %p327 = pneg %p326
      // Predicated region
      $region37: #{tpu_custom_call.1} parent=5 // pred_check
        _
      $region38: #{tpu_custom_call.1} parent=5 // pred_check_branch
        %329 = sbr.rel (%p326) target = $region40
      $region39: #{tpu_custom_call.1} parent=5 // pred_region
        %s330 = ssub.s32 %s28, 1
        %s331 = sand.u32 %s55, 1
        %s332 = scalar_lea.sflag [#allocation3], %s331
        %s333 = sand.u32 %s55, 1
        %s334 = smul.addr %s333, 8
        %s335 = scalar_lea.vmem [#allocation2], %s334
        // Predicated region
        $region41: #{tpu_custom_call.1} parent=39 // pred_check
          %p336 = pneg %p68
        $region42: #{tpu_custom_call.1} parent=39 // pred_check_branch
          %338 = sbr.rel (%p336) target = $region44
        $region43: #{tpu_custom_call.1} parent=39 // pred_region
          %339 = dma.done %s332, 128
        $region44: #{tpu_custom_call.1} parent=39 // pred_fallthru
          _
        // Predicated region
        $region45: #{tpu_custom_call.1} parent=39 // pred_check
          %p340 = pneg %p131
        $region46: #{tpu_custom_call.1} parent=39 // pred_check_branch
          %342 = sbr.rel (%p340) target = $region48
        $region47: #{tpu_custom_call.1} parent=39 // pred_region
          %343 = dma.done [#allocation6], 256
        $region48: #{tpu_custom_call.1} parent=39 // pred_fallthru
          _
        %s344 = sand.u32 %s55, 1
        %s345 = scalar_lea.sflag [#allocation3], %s344
        %s346 = sand.u32 %s55, 1
        %s347 = smul.addr %s346, 8
        %s348 = scalar_lea.vmem [#allocation2], %s347
        %p349 = pneg %p68
        %p350 = pneg %p65
        %p351 = pneg %p89
        %p352 = pneg %p86
        %p353 = pneg %p110
        %p354 = pneg %p107
        %p355 = pneg %p131
        %p356 = pneg %p128
        %p357 = pneg %p152
        %p358 = pneg %p149
        %p359 = pneg %p180
        %p360 = pneg %p177
        %s361 = sand.u32 %s167, 1
        %s362 = scalar_lea.sflag [#allocation4], %s361
        %s363 = sand.u32 %s167, 1
        %s364 = smul.addr %s363, 4
        %s365 = scalar_lea.vmem [#allocation7], %s364
        %p366 = pneg %p208
        %p367 = pneg %p205
        %s368 = sand.u32 %s33, 1
        %s369 = scalar_lea.sflag [#allocation9], %s368
        %s370 = sand.u32 %s195, 1
        %s371 = smul.addr %s370, 4
        %s372 = scalar_lea.vmem [#allocation8], %s371
        %p373 = pneg %p236
        %p374 = pneg %p233
        %s375 = sand.u32 %s33, 1
        %s376 = scalar_lea.sflag [#allocation9], %s375
        %s377 = sand.u32 %s223, 1
        %s378 = smul.addr %s377, 4
        %s379 = scalar_lea.vmem [#allocation10], %s378
        %p380 = pneg %p264
        %p381 = pneg %p261
        %s382 = sand.u32 %s251, 1
        %s383 = scalar_lea.sflag [#allocation12], %s382
        %s384 = sand.u32 %s251, 1
        %s385 = smul.addr %s384, 8
        %s386 = scalar_lea.vmem [#allocation11], %s385
        %v388 = vld [vmem:[%s335] sm:$0xff]
        %v389 = vld [vmem:[%s1] sm:$0x1]
        %v390 = vld [vmem:[%s2] sm:$0x1]
        %vm391 = vcmask 261120
        %v392 = vsel %vm391, %v388, 0.0
        %393 = vadd.xlane.f32.xlu0 %v392
        %v394 = vpop.xlane.xlu0 %393
        %v395 = vrcp.pop 32.0
        %v396 = vmul.f32 %v394, %v395
        %v397 = vsub.f32 %v388, %v396
        %v398 = vmul.f32 %v397, %v397
        %v399 = vsel %vm391, %v398, 0.0
        %400 = vadd.xlane.f32.xlu0 %v399
        %v401 = vpop.xlane.xlu0 %400
        %v402 = vmul.f32 %v401, %v395
        %v403 = vadd.f32 %v402, 1e-05
        %v404 = vrsqrt.pop %v403
        %v405 = vmul.f32 %v397, %v404
        %v407 = vlaneseq
        %v408 = vshrl.u32 %v407, 7
        %v409 = vsub.s32 0, %v408
        %v410 = vrot.slane %v389, %v409
        %v412 = vmul.f32 %v405, %v410
        %v414 = vlaneseq
        %v415 = vshrl.u32 %v414, 7
        %v416 = vsub.s32 0, %v415
        %v417 = vrot.slane %v390, %v416
        %v419 = vadd.f32 %v412, %v417
        %v420 = vpack.c.bf16 %v419, %v419
        %v421 = vld [vmem:[#allocation5] sm:$0xf]
        %v422 = vld [vmem:[#allocation5 + $0x4] sm:$0xf]
        %v423 = vld [vmem:[#allocation5 + $0x8] sm:$0xf]
        %v424 = vld [vmem:[#allocation5 + $0xc] sm:$0xf]
        %v425 = vld [vmem:[%s4] sm:$0x1]
        %v427 = vlaneseq
        %v428 = vshrl.u32 %v427, 7
        %v429 = vsub.s32 0, %v428
        %v430 = vrot.slane %v425, %v429
        %v436 = vunpack.c.l.b16 %v421
        %v437 = vunpack.c.l.b16 %v422
        %v438 = vunpack.c.l.b16 %v423
        %v439 = vunpack.c.l.b16 %v424
        %v440 = vpack.c.b16 %v437, %v436
        %v441 = vpack.c.b16 %v439, %v438
        %v445 = vsel %vm391, %v420, 0
        %447 = vmatprep.subr.bf16.mxu0 0
        %448 = vmatpush1.bf16.msra.mxu0 %v440
        %449 = vmatprep.subr.bf16.mxu0 0
        %450 = vmatpush1.bf16.msra.mxu0 %v441
        %451 = vmatprep.subr.bf16.mxu0 0
        %452 = vmatpush1.bf16.msra.mxu0 0
        %453 = vmatprep.subr.bf16.mxu0 0
        %454 = vmatpush1.bf16.msra.mxu0 0
        %455 = vmatprep.subr.bf16.mxu0 0
        %456 = vmatpush1.bf16.msra.mxu0 0
        %457 = vmatprep.subr.bf16.mxu0 0
        %458 = vmatpush1.bf16.msra.mxu0 0
        %459 = vmatprep.subr.bf16.mxu0 0
        %460 = vmatpush1.bf16.msra.mxu0 0
        %461 = vmatprep.subr.bf16.mxu0 0
        %462 = vmatpush1.bf16.msra.mxu0 0
        %463 = vmatprep.subr.bf16.mxu0 0
        %464 = vmatpush1.bf16.msra.mxu0 0
        %465 = vmatprep.subr.bf16.mxu0 0
        %466 = vmatpush1.bf16.msra.mxu0 0
        %467 = vmatprep.subr.bf16.mxu0 0
        %468 = vmatpush1.bf16.msra.mxu0 0
        %469 = vmatprep.subr.bf16.mxu0 0
        %470 = vmatpush1.bf16.msra.mxu0 0
        %471 = vmatprep.subr.bf16.mxu0 0
        %472 = vmatpush1.bf16.msra.mxu0 0
        %473 = vmatprep.subr.bf16.mxu0 0
        %474 = vmatpush1.bf16.msra.mxu0 0
        %475 = vmatprep.subr.bf16.mxu0 0
        %476 = vmatpush1.bf16.msra.mxu0 0
        %477 = vmatprep.subr.bf16.mxu0 0
        %478 = vmatpush1.bf16.msra.mxu0 0
        %479 = vmatprep.mubr.bf16.mxu0 0
        %480 = vmatmul.mubr.bf16.gmra.mrb[0].mxu0 %v445
        %v481 = vpop.f32.mrb[0].mxu0
        %v482 = vadd.f32 %v430, %v481
        %v483 = vpop.f32.mrb[0].mxu0
        %v484 = vpop.f32.mrb[0].mxu0
        %v485 = vpop.f32.mrb[0].mxu0
        %486 = vdwg.mxu0
        %v487 = vpack.c.bf16 %v482, %v482
        %vm488 = vcmask 257024
        %489 = vst.msk [vmem:[%s365] sm:$0xf] %vm488, %v487
        %v491 = vunpack.c.l.b16 %v487
        %v492 = vpack.c.b16 %v491, %v491
        %493 = vrot.lane.b32.xlu0 %v492, 96
        %v494 = vpop.permute.xlu0 %493
        %496 = vst.msk [vmem:[%s372] sm:$0xf] %vm488, %v494
        %497 = vrot.lane.b32.xlu0 %v492, 64
        %v498 = vpop.permute.xlu0 %497
        %500 = vst.msk [vmem:[%s379] sm:$0xf] %vm488, %v498
        %502 = vrot.lane.b32.xlu0 %v482, 32
        %v503 = vpop.permute.xlu0 %502
        %505 = vst.msk [vmem:[%s386] sm:$0xff] %vm391, %v503
        %s506 = sand.u32 %s167, 1
        %s507 = scalar_lea.sflag [#allocation4], %s506
        %s508 = sand.u32 %s167, 1
        %s509 = smul.addr %s508, 4
        %s510 = scalar_lea.vmem [#allocation7], %s509
        %s511 = sand.u32 %s33, 1
        %s512 = scalar_lea.sflag [#allocation9], %s511
        %s513 = sand.u32 %s195, 1
        %s514 = smul.addr %s513, 4
        %s515 = scalar_lea.vmem [#allocation8], %s514
        %s516 = sand.u32 %s33, 1
        %s517 = scalar_lea.sflag [#allocation9], %s516
        %s518 = sand.u32 %s223, 1
        %s519 = smul.addr %s518, 4
        %s520 = scalar_lea.vmem [#allocation10], %s519
        %s521 = sand.u32 %s251, 1
        %s522 = scalar_lea.sflag [#allocation12], %s521
        %s523 = sand.u32 %s251, 1
        %s524 = smul.addr %s523, 8
        %s525 = scalar_lea.vmem [#allocation11], %s524
        // Predicated region
        $region49: #{tpu_custom_call.1} parent=39 // pred_check
          %p526 = pneg %p177
        $region50: #{tpu_custom_call.1} parent=39 // pred_check_branch
          %528 = sbr.rel (%p526) target = $region52
        $region51: #{tpu_custom_call.1} parent=39 // pred_region
          %s530 = ssub.s32 64, 64
          %531 = vsyncadd %s507, %s530
          %s532 = sadd.s32 %s38, %s37
          %s533 = smul.addr %s532, 64
          %s534 = scalar_lea.hbm %s5, %s533
          %s536 = sshll.u32 %s510, 4
          %s537 = int_to_ptr.vmem [resolvable:$true] %s536
          %539 = dma.vmem_to_hbm [thread:$0]  %s537, 64, %s534, %s507
        $region52: #{tpu_custom_call.1} parent=39 // pred_fallthru
          _
        // Predicated region
        $region53: #{tpu_custom_call.1} parent=39 // pred_check
          %p540 = pneg %p205
        $region54: #{tpu_custom_call.1} parent=39 // pred_check_branch
          %542 = sbr.rel (%p540) target = $region56
        $region55: #{tpu_custom_call.1} parent=39 // pred_region
          %s544 = ssub.s32 64, 64
          %545 = vsyncadd %s512, %s544
          %s546 = sadd.s32 %s38, %s37
          %s547 = smul.addr %s546, 64
          %s548 = scalar_lea.hbm %s6, %s547
          %s550 = sshll.u32 %s515, 4
          %s551 = int_to_ptr.vmem [resolvable:$true] %s550
          %553 = dma.vmem_to_hbm [thread:$0]  %s551, 64, %s548, %s512
        $region56: #{tpu_custom_call.1} parent=39 // pred_fallthru
          _
        // Predicated region
        $region57: #{tpu_custom_call.1} parent=39 // pred_check
          %p554 = pneg %p233
        $region58: #{tpu_custom_call.1} parent=39 // pred_check_branch
          %556 = sbr.rel (%p554) target = $region60
        $region59: #{tpu_custom_call.1} parent=39 // pred_region
          %s558 = ssub.s32 64, 64
          %559 = vsyncadd %s517, %s558
          %s560 = sadd.s32 %s38, %s37
          %s561 = smul.addr %s560, 64
          %s562 = scalar_lea.hbm %s7, %s561
          %s564 = sshll.u32 %s520, 4
          %s565 = int_to_ptr.vmem [resolvable:$true] %s564
          %567 = dma.vmem_to_hbm [thread:$0]  %s565, 64, %s562, %s517
        $region60: #{tpu_custom_call.1} parent=39 // pred_fallthru
          _
        // Predicated region
        $region61: #{tpu_custom_call.1} parent=39 // pred_check
          %p568 = pneg %p261
        $region62: #{tpu_custom_call.1} parent=39 // pred_check_branch
          %570 = sbr.rel (%p568) target = $region64
        $region63: #{tpu_custom_call.1} parent=39 // pred_region
          %s572 = ssub.s32 128, 128
          %573 = vsyncadd %s522, %s572
          %s574 = sadd.s32 %s38, %s37
          %s575 = smul.addr %s574, 128
          %s576 = scalar_lea.hbm %s8, %s575
          %s578 = sshll.u32 %s525, 4
          %s579 = int_to_ptr.vmem [resolvable:$true] %s578
          %581 = dma.vmem_to_hbm [thread:$0]  %s579, 128, %s576, %s522
        $region64: #{tpu_custom_call.1} parent=39 // pred_fallthru
          _
      $region40: #{tpu_custom_call.1} parent=5 // pred_fallthru
        _
      %p582 = scmp.le.s32.totalorder 2, %s28
      // Predicated region
      $region65: #{tpu_custom_call.1} parent=5 // pred_check
        %p583 = pneg %p582
      $region66: #{tpu_custom_call.1} parent=5 // pred_check_branch
        %585 = sbr.rel (%p583) target = $region68
      $region67: #{tpu_custom_call.1} parent=5 // pred_region
        %s586 = ssub.s32 %s28, 2
        // Predicated region
        $region69: #{tpu_custom_call.1} parent=67 // pred_check
          %p587 = pneg %p183
        $region70: #{tpu_custom_call.1} parent=67 // pred_check_branch
          %589 = sbr.rel (%p587) target = $region72
        $region71: #{tpu_custom_call.1} parent=67 // pred_region
          %s590 = sand.u32 %s168, 1
          %s591 = scalar_lea.sflag [#allocation4], %s590
          %s592 = sand.u32 %s168, 1
          %s593 = smul.addr %s592, 4
          %s594 = scalar_lea.vmem [#allocation7], %s593
          %595 = dma.done %s591, 64
        $region72: #{tpu_custom_call.1} parent=67 // pred_fallthru
          _
        // Predicated region
        $region73: #{tpu_custom_call.1} parent=67 // pred_check
          %p596 = pneg %p211
        $region74: #{tpu_custom_call.1} parent=67 // pred_check_branch
          %598 = sbr.rel (%p596) target = $region76
        $region75: #{tpu_custom_call.1} parent=67 // pred_region
          %s599 = sand.u32 %s34, 1
          %s600 = scalar_lea.sflag [#allocation9], %s599
          %s601 = sand.u32 %s196, 1
          %s602 = smul.addr %s601, 4
          %s603 = scalar_lea.vmem [#allocation8], %s602
          %604 = dma.done %s600, 64
        $region76: #{tpu_custom_call.1} parent=67 // pred_fallthru
          _
        // Predicated region
        $region77: #{tpu_custom_call.1} parent=67 // pred_check
          %p605 = pneg %p239
        $region78: #{tpu_custom_call.1} parent=67 // pred_check_branch
          %607 = sbr.rel (%p605) target = $region80
        $region79: #{tpu_custom_call.1} parent=67 // pred_region
          %s608 = sand.u32 %s34, 1
          %s609 = scalar_lea.sflag [#allocation9], %s608
          %s610 = sand.u32 %s224, 1
          %s611 = smul.addr %s610, 4
          %s612 = scalar_lea.vmem [#allocation10], %s611
          %613 = dma.done %s609, 64
        $region80: #{tpu_custom_call.1} parent=67 // pred_fallthru
          _
        // Predicated region
        $region81: #{tpu_custom_call.1} parent=67 // pred_check
          %p614 = pneg %p267
        $region82: #{tpu_custom_call.1} parent=67 // pred_check_branch
          %616 = sbr.rel (%p614) target = $region84
        $region83: #{tpu_custom_call.1} parent=67 // pred_region
          %s617 = sand.u32 %s252, 1
          %s618 = scalar_lea.sflag [#allocation12], %s617
          %s619 = sand.u32 %s252, 1
          %s620 = smul.addr %s619, 8
          %s621 = scalar_lea.vmem [#allocation11], %s620
          %622 = dma.done %s618, 128
        $region84: #{tpu_custom_call.1} parent=67 // pred_fallthru
          _
      $region68: #{tpu_custom_call.1} parent=5 // pred_fallthru
        _
    $region6: #{tpu_custom_call.1} parent=1 // loop_footer
      %s32 = sadd.s32 1, %s28
    $region7: #{tpu_custom_call.1} parent=1 // loop_footer_branch
      %27 = sbr.rel target = $region3
    $region8: #{tpu_custom_call.1} parent=1 // loop_exit
      _
    %623 = vsyncpa [#allocation3], 1
    %s624 = scalar_lea.sflag [#allocation3], 1
    %625 = vsyncpa %s624, 1
    %626 = vsyncpa [#allocation6], 1
    %627 = vsyncpa [#allocation4], 1
    %s628 = scalar_lea.sflag [#allocation4], 1
    %629 = vsyncpa %s628, 1
    %630 = vsyncpa [#allocation9], 1
    %s631 = scalar_lea.sflag [#allocation9], 1
    %632 = vsyncpa %s631, 1
    %633 = vsyncpa [#allocation12], 1
    %s634 = scalar_lea.sflag [#allocation12], 1
    %635 = vsyncpa %s634, 1

</llo_original>
